<compile_context>
chip_gen: v7x
topology: tpu7x:2x2x1
jax: 0.10.0
libtpu: 0.0.40
codegen_flags: <defaults>
</compile_context>

<pallas_src>
import functools

import jax
import jax.numpy as jnp
from jax import lax
from jax.experimental import pallas as pl
from jax.experimental.pallas import tpu as pltpu

LANE = 128


def _round_up(x, m):
    return ((x + m - 1) // m) * m


def _gelu(x):
    # NOTE: tanh-approx GELU (PyTorch F.gelu default is exact erf; diff ~1e-3).
    c = jnp.float32(0.7978845608028654)  # sqrt(2/pi)
    return 0.5 * x * (1.0 + jnp.tanh(c * (x + 0.044715 * x * x * x)))


# ----------------------------------------------------------------------------
# Fused kernel
#   inputs : src, dst, y (SMEM int32 (E,)),
#            a_norm (N,N), x (N,Hin), gcn_w (Hin,HP), gcn_b/gamma/beta (1,HP),
#            w1a/w1b (HP,HP), b1 (1,HP), w2 (HP,CP), b2 (1,CP), class_w (1,CP)
#   outputs: probs_padded (E,CP) VMEM, loss (1,1) VMEM
#   scratch: ua (N,HP), ub (N,HP), g (E,HP), yoh (E,CP)   -- all VMEM
# ----------------------------------------------------------------------------
def _fused_kernel(num_classes,
                  src_ref, dst_ref, y_ref,
                  a_ref, x_ref, w_ref, b_ref, gamma_ref, beta_ref,
                  w1a_ref, w1b_ref, b1_ref, w2_ref, b2_ref, cw_ref,
                  probs_ref, loss_ref,
                  ua_ref, ub_ref, g_ref, yoh_ref):
    n = x_ref.shape[0]
    e = g_ref.shape[0]
    cp = probs_ref.shape[1]

    # ---- GCNConv: A_norm @ (X @ W) + b  (feature axis pre-padded to 128) ----
    xw = jnp.dot(x_ref[...], w_ref[...], preferred_element_type=jnp.float32)
    h = jnp.dot(a_ref[...], xw, preferred_element_type=jnp.float32) + b_ref[...]

    # ---- GELU + BatchNorm1d (training-mode batch statistics, biased var) ----
    h = _gelu(h)
    inv_n = jnp.float32(1.0 / n)
    mean = jnp.sum(h, axis=0, keepdims=True) * inv_n
    d = h - mean
    var = jnp.sum(d * d, axis=0, keepdims=True) * inv_n
    xn = gamma_ref[...] * (d * lax.rsqrt(var + 1e-5)) + beta_ref[...]
    # (padded feature columns stay exactly 0: zero-padded b / gamma / beta)

    # ---- node-side halves of linear1: hoists E*H*H matmul work down to N*H*H ----
    ua_ref[...] = jnp.dot(xn, w1a_ref[...], preferred_element_type=jnp.float32)
    ub_ref[...] = jnp.dot(xn, w1b_ref[...], preferred_element_type=jnp.float32)

    # ---- per-edge gather via scalar SMEM indices + label one-hot --------------
    lane_iota = lax.broadcasted_iota(jnp.int32, (1, cp), 1)
    # E is small & static here, so this loop is intentionally fully unrolled.
    # TODO(synk): for large E switch to an E-tiled "parallel" grid with
    #             pl.Element(1) index maps driven by scalar prefetch.
    for i in range(e):
        s = src_ref[i]          # indices assumed in-range (graph construction glue)
        t = dst_ref[i]
        yv = y_ref[i]
        g_ref[pl.ds(i, 1), :] = ua_ref[pl.ds(s, 1), :] + ub_ref[pl.ds(t, 1), :]
        yoh_ref[pl.ds(i, 1), :] = (lane_iota == yv).astype(jnp.float32)

    # ---- rest of the edge classifier: GELU -> linear2 -> softmax -> CE --------
    h1 = _gelu(g_ref[...] + b1_ref[...])
    logits = jnp.dot(h1, w2_ref[...], preferred_element_type=jnp.float32) + b2_ref[...]

    valid = lane_iota < num_classes                    # (1, CP) class-lane mask
    masked = jnp.where(valid, logits, jnp.float32(-1e30))
    m = jnp.max(masked, axis=-1, keepdims=True)
    ez = jnp.exp(masked - m)                           # pad lanes underflow to 0
    ssum = jnp.sum(ez, axis=-1, keepdims=True)
    probs_ref[...] = ez / ssum                         # lane-dense (E, 128) store

    # class-weighted cross-entropy == torch.nn.CrossEntropyLoss(weight, 'mean')
    logp = masked - m - jnp.log(ssum)
    yoh = yoh_ref[...]
    w_y = jnp.sum(cw_ref[...] * yoh, axis=-1, keepdims=True)   # (E,1) = weight[y_e]
    nll = -jnp.sum(logp * yoh, axis=-1, keepdims=True)         # (E,1)
    num = jnp.sum(w_y * nll, axis=0, keepdims=True)            # (1,1)
    den = jnp.sum(w_y, axis=0, keepdims=True)
    loss_ref[...] = num / den


@functools.partial(jax.jit, static_argnames=("num_classes",))
def gcn_edge_forward(a_norm, cls_tokens, gcn_w, gcn_b, bn_gamma, bn_beta,
                     w1, b1, w2, b2, class_w, src, dst, ylabels, *, num_classes):
    n, _ = cls_tokens.shape
    hout = gcn_w.shape[1]
    e = src.shape[0]
    hp = _round_up(max(hout, LANE), LANE)      # lane-dense hidden width
    cp = _round_up(max(num_classes, LANE), LANE)

    def pad_to(arr, rows, cols):
        return jnp.pad(arr, ((0, rows - arr.shape[0]), (0, cols - arr.shape[1])))

    w1a, w1b = w1[:hout], w1[hout:]            # concat([x_u, x_v]) @ W1 split
    gcn_w_p = pad_to(gcn_w, gcn_w.shape[0], hp)
    gcn_b_p = pad_to(gcn_b, 1, hp)
    gamma_p = pad_to(bn_gamma, 1, hp)
    beta_p = pad_to(bn_beta, 1, hp)
    w1a_p = pad_to(w1a, hp, hp)
    w1b_p = pad_to(w1b, hp, hp)
    b1_p = pad_to(b1, 1, hp)
    w2_p = pad_to(w2, hp, cp)
    b2_p = pad_to(b2, 1, cp)
    cw_p = pad_to(class_w, 1, cp)

    smem = pl.BlockSpec(memory_space=pltpu.MemorySpace.SMEM)
    vmem = pl.BlockSpec(memory_space=pltpu.MemorySpace.VMEM)
    kernel = functools.partial(_fused_kernel, num_classes)

    # Grid-less single invocation: whole-array VMEM/SMEM residents, no
    # double-buffer cost, node features never round-trip through HBM.
    probs_p, loss = pl.pallas_call(
        kernel,
        out_shape=(jax.ShapeDtypeStruct((e, cp), jnp.float32),
                   jax.ShapeDtypeStruct((1, 1), jnp.float32)),
        in_specs=[smem, smem, smem] + [vmem] * 12,
        out_specs=(vmem, vmem),
        scratch_shapes=[pltpu.VMEM((n, hp), jnp.float32),   # x @ W1[:H]
                        pltpu.VMEM((n, hp), jnp.float32),   # x @ W1[H:]
                        pltpu.VMEM((e, hp), jnp.float32),   # gathered edge repr
                        pltpu.VMEM((e, cp), jnp.float32)],  # one-hot labels
    )(src, dst, ylabels, a_norm, cls_tokens, gcn_w_p, gcn_b_p, gamma_p, beta_p,
      w1a_p, w1b_p, b1_p, w2_p, b2_p, cw_p)

    return loss[0, 0], probs_p[:, :num_classes]


if __name__ == "__main__":
    key = jax.random.PRNGKey(0)
    k_cls, k_w, k_w1, k_b1, k_w2, k_b2 = jax.random.split(key, 6)

    HIDDEN = 32          # config.hidden_size (* max_seq_len folded in)
    GNN_OUT = 16         # args.gnn_layer1_out_dim
    NUM_CLASSES = 2      # args.num_classes
    EDGE_PERCENT = 0.3   # args.edge_percent
    NODES_PER_GRAPH = 5
    NUM_GRAPHS = 2
    N = NODES_PER_GRAPH * NUM_GRAPHS

    # TODO(synk): the BERT encoder (AutoModel) producing the node embeddings has no
    # clean single-kernel equivalent here; cls_tokens are synthesized as the GCN input.
    cls_tokens = jax.random.normal(k_cls, (N, HIDDEN), dtype=jnp.float32)

    # GCN message-passing edges: a ring inside each graph, both directions.
    ring = [(i, (i + 1) % NODES_PER_GRAPH) for i in range(NODES_PER_GRAPH)]
    gcn_src, gcn_dst = [], []
    for g in range(NUM_GRAPHS):
        off = g * NODES_PER_GRAPH
        for (u, v) in ring:
            gcn_src += [u + off, v + off]
            gcn_dst += [v + off, u + off]
    gcn_src = jnp.array(gcn_src, dtype=jnp.int32)
    gcn_dst = jnp.array(gcn_dst, dtype=jnp.int32)

    # all candidate edges (all_edges) with binary labels (1 iff a real graph edge)
    ring_set = set(ring) | set((v, u) for (u, v) in ring)
    esrc, edst, ylab = [], [], []
    for g in range(NUM_GRAPHS):
        off = g * NODES_PER_GRAPH
        for i in range(NODES_PER_GRAPH):
            for j in range(i + 1, NODES_PER_GRAPH):
                esrc.append(i + off)
                edst.append(j + off)
                ylab.append(1 if (i, j) in ring_set else 0)
    E = len(ylab)
    src = jnp.array(esrc, dtype=jnp.int32)
    dst = jnp.array(edst, dtype=jnp.int32)
    ylabels = jnp.array(ylab, dtype=jnp.int32)

    # normalized adjacency D^{-1/2}(A+I)D^{-1/2} (PyG GCNConv gcn_norm), built as glue
    A = jnp.zeros((N, N), jnp.float32).at[gcn_dst, gcn_src].add(1.0) + jnp.eye(N, dtype=jnp.float32)
    deg = jnp.sum(A, axis=1)
    dinv = 1.0 / jnp.sqrt(deg)
    a_norm = dinv[:, None] * A * dinv[None, :]

    # deterministic parameter init (shapes follow the module's __init__)
    def xavier(k, fan_in, fan_out, shape):
        bound = (6.0 / (fan_in + fan_out)) ** 0.5
        return jax.random.uniform(k, shape, jnp.float32, -bound, bound)

    gcn_w = xavier(k_w, HIDDEN, GNN_OUT, (HIDDEN, GNN_OUT))        # GCNConv weight
    gcn_b = jnp.zeros((1, GNN_OUT), jnp.float32)                    # GCNConv bias
    bn_gamma = jnp.ones((1, GNN_OUT), jnp.float32)                  # BatchNorm1d weight
    bn_beta = jnp.zeros((1, GNN_OUT), jnp.float32)                  # BatchNorm1d bias

    w1 = xavier(k_w1, 2 * GNN_OUT, GNN_OUT, (2 * GNN_OUT, GNN_OUT))  # linear1
    b1 = jax.random.uniform(k_b1, (1, GNN_OUT), jnp.float32,
                            -(1.0 / (2 * GNN_OUT)) ** 0.5, (1.0 / (2 * GNN_OUT)) ** 0.5)
    w2 = xavier(k_w2, GNN_OUT, NUM_CLASSES, (GNN_OUT, NUM_CLASSES))  # linear2
    b2 = jax.random.uniform(k_b2, (1, NUM_CLASSES), jnp.float32,
                            -(1.0 / GNN_OUT) ** 0.5, (1.0 / GNN_OUT) ** 0.5)
    class_w = jnp.array([[EDGE_PERCENT, 1.0 - EDGE_PERCENT]], dtype=jnp.float32)

    # ---- fused forward ----
    # TODO(synk): F.dropout (training-mode RNG dropout) omitted for determinism.
    loss, probs = gcn_edge_forward(a_norm, cls_tokens, gcn_w, gcn_b, bn_gamma, bn_beta,
                                   w1, b1, w2, b2, class_w, src, dst, ylabels,
                                   num_classes=NUM_CLASSES)
    jax.block_until_ready((loss, probs))

    # pure-JAX reference (same tanh-GELU), loose tolerance
    def _ref():
        hh = jnp.dot(cls_tokens, gcn_w, precision=lax.Precision.HIGHEST)
        hh = jnp.dot(a_norm, hh, precision=lax.Precision.HIGHEST) + gcn_b
        hh = _gelu(hh)
        mean = jnp.mean(hh, axis=0, keepdims=True)
        var = jnp.mean((hh - mean) ** 2, axis=0, keepdims=True)
        xn = bn_gamma * (hh - mean) / jnp.sqrt(var + 1e-5) + bn_beta
        er = jnp.concatenate([xn[src], xn[dst]], axis=-1)
        z = _gelu(jnp.dot(er, w1, precision=lax.Precision.HIGHEST) + b1)
        logits = jnp.dot(z, w2, precision=lax.Precision.HIGHEST) + b2
        p = jax.nn.softmax(logits, axis=-1)
        lp = jax.nn.log_softmax(logits, axis=-1)
        wy = class_w[0, ylabels]
        l = jnp.sum(wy * (-lp[jnp.arange(E), ylabels])) / jnp.sum(wy)
        return l, p

    ref_loss, ref_probs = _ref()

    assert bool(jnp.isfinite(loss)) and bool(jnp.isfinite(probs).all())
    assert bool(jnp.allclose(jnp.sum(probs, axis=-1), 1.0, atol=1e-4))
    assert bool(jnp.allclose(probs, ref_probs, atol=2e-3, rtol=2e-3))
    assert bool(jnp.allclose(loss, ref_loss, atol=2e-3, rtol=2e-3))
    print("KERNEL_OK")
</pallas_src>

<mosaic_0001>
module attributes {stable_mosaic.version = 11 : i64} {
  func.func @_fused_kernel(%arg0: memref<20xi32, #tpu.memory_space<smem>>, %arg1: memref<20xi32, #tpu.memory_space<smem>>, %arg2: memref<20xi32, #tpu.memory_space<smem>>, %arg3: memref<10x10xf32, #tpu.memory_space<vmem>>, %arg4: memref<10x32xf32, #tpu.memory_space<vmem>>, %arg5: memref<32x128xf32, #tpu.memory_space<vmem>>, %arg6: memref<1x128xf32, #tpu.memory_space<vmem>>, %arg7: memref<1x128xf32, #tpu.memory_space<vmem>>, %arg8: memref<1x128xf32, #tpu.memory_space<vmem>>, %arg9: memref<128x128xf32, #tpu.memory_space<vmem>>, %arg10: memref<128x128xf32, #tpu.memory_space<vmem>>, %arg11: memref<1x128xf32, #tpu.memory_space<vmem>>, %arg12: memref<128x128xf32, #tpu.memory_space<vmem>>, %arg13: memref<1x128xf32, #tpu.memory_space<vmem>>, %arg14: memref<1x128xf32, #tpu.memory_space<vmem>>, %arg15: memref<20x128xf32, #tpu.memory_space<vmem>>, %arg16: memref<1x1xf32, #tpu.memory_space<vmem>>, %arg17: memref<10x128xf32, #tpu.memory_space<vmem>>, %arg18: memref<10x128xf32, #tpu.memory_space<vmem>>, %arg19: memref<20x128xf32, #tpu.memory_space<vmem>>, %arg20: memref<20x128xf32, #tpu.memory_space<vmem>>) attributes {dimension_semantics = [], scalar_prefetch = 0 : i64, scratch_operands = 4 : i64, tpu.core_type = #tpu.core_type<tc>} {
    %c0 = arith.constant 0 : index
    %c0_0 = arith.constant 0 : index
    %0 = vector.load %arg4[%c0, %c0_0] : memref<10x32xf32, #tpu.memory_space<vmem>>, vector<10x32xf32>
    %c0_1 = arith.constant 0 : index
    %c0_2 = arith.constant 0 : index
    %1 = vector.load %arg5[%c0_1, %c0_2] : memref<32x128xf32, #tpu.memory_space<vmem>>, vector<32x128xf32>
    %cst = arith.constant dense<0.000000e+00> : vector<10x128xf32>
    %2 = tpu.matmul %0, %1, %cst {dimension_numbers = #tpu.dot_dimension_numbers<[1], [0], [0], [1], [0, 0, 1, 1], [], []>} : vector<10x32xf32>, vector<32x128xf32>, vector<10x128xf32> -> vector<10x128xf32>
    %c0_3 = arith.constant 0 : index
    %c0_4 = arith.constant 0 : index
    %3 = vector.load %arg3[%c0_3, %c0_4] : memref<10x10xf32, #tpu.memory_space<vmem>>, vector<10x10xf32>
    %cst_5 = arith.constant dense<0.000000e+00> : vector<10x128xf32>
    %4 = tpu.matmul %3, %2, %cst_5 {dimension_numbers = #tpu.dot_dimension_numbers<[1], [0], [0], [1], [0, 0, 1, 1], [], []>} : vector<10x10xf32>, vector<10x128xf32>, vector<10x128xf32> -> vector<10x128xf32>
    %c0_6 = arith.constant 0 : index
    %c0_7 = arith.constant 0 : index
    %5 = vector.load %arg6[%c0_6, %c0_7] : memref<1x128xf32, #tpu.memory_space<vmem>>, vector<1x128xf32>
    %6 = vector.broadcast %5 : vector<1x128xf32> to vector<10x128xf32>
    %7 = arith.addf %4, %6 : vector<10x128xf32>
    %cst_8 = arith.constant 5.000000e-01 : f32
    %8 = vector.broadcast %cst_8 : f32 to vector<10x128xf32>
    %9 = arith.mulf %8, %7 : vector<10x128xf32>
    %cst_9 = arith.constant 4.471500e-02 : f32
    %10 = vector.broadcast %cst_9 : f32 to vector<10x128xf32>
    %11 = arith.mulf %10, %7 : vector<10x128xf32>
    %12 = arith.mulf %11, %7 : vector<10x128xf32>
    %13 = arith.mulf %12, %7 : vector<10x128xf32>
    %14 = arith.addf %7, %13 : vector<10x128xf32>
    %cst_10 = arith.constant 0.797884583 : f32
    %15 = vector.broadcast %cst_10 : f32 to vector<10x128xf32>
    %16 = arith.mulf %15, %14 : vector<10x128xf32>
    %17 = math.tanh %16 : vector<10x128xf32>
    %cst_11 = arith.constant 1.000000e+00 : f32
    %18 = vector.broadcast %cst_11 : f32 to vector<10x128xf32>
    %19 = arith.addf %18, %17 : vector<10x128xf32>
    %20 = arith.mulf %9, %19 : vector<10x128xf32>
    %cst_12 = arith.constant dense<0.000000e+00> : vector<128xf32>
    %21 = vector.multi_reduction <add>, %20, %cst_12 [0] : vector<10x128xf32> to vector<128xf32>
    %22 = vector.shape_cast %21 : vector<128xf32> to vector<1x128xf32>
    %cst_13 = arith.constant 1.000000e-01 : f32
    %23 = vector.broadcast %cst_13 : f32 to vector<1x128xf32>
    %24 = arith.mulf %22, %23 : vector<1x128xf32>
    %25 = vector.broadcast %24 : vector<1x128xf32> to vector<10x128xf32>
    %26 = arith.subf %20, %25 : vector<10x128xf32>
    %27 = arith.mulf %26, %26 : vector<10x128xf32>
    %cst_14 = arith.constant dense<0.000000e+00> : vector<128xf32>
    %28 = vector.multi_reduction <add>, %27, %cst_14 [0] : vector<10x128xf32> to vector<128xf32>
    %29 = vector.shape_cast %28 : vector<128xf32> to vector<1x128xf32>
    %cst_15 = arith.constant 1.000000e-01 : f32
    %30 = vector.broadcast %cst_15 : f32 to vector<1x128xf32>
    %31 = arith.mulf %29, %30 : vector<1x128xf32>
    %c0_16 = arith.constant 0 : index
    %c0_17 = arith.constant 0 : index
    %32 = vector.load %arg7[%c0_16, %c0_17] : memref<1x128xf32, #tpu.memory_space<vmem>>, vector<1x128xf32>
    %cst_18 = arith.constant 9.99999974E-6 : f32
    %33 = vector.broadcast %cst_18 : f32 to vector<1x128xf32>
    %34 = arith.addf %31, %33 : vector<1x128xf32>
    %35 = math.rsqrt %34 : vector<1x128xf32>
    %36 = vector.broadcast %35 : vector<1x128xf32> to vector<10x128xf32>
    %37 = arith.mulf %26, %36 : vector<10x128xf32>
    %38 = vector.broadcast %32 : vector<1x128xf32> to vector<10x128xf32>
    %39 = arith.mulf %38, %37 : vector<10x128xf32>
    %c0_19 = arith.constant 0 : index
    %c0_20 = arith.constant 0 : index
    %40 = vector.load %arg8[%c0_19, %c0_20] : memref<1x128xf32, #tpu.memory_space<vmem>>, vector<1x128xf32>
    %41 = vector.broadcast %40 : vector<1x128xf32> to vector<10x128xf32>
    %42 = arith.addf %39, %41 : vector<10x128xf32>
    %c0_21 = arith.constant 0 : index
    %c0_22 = arith.constant 0 : index
    %43 = vector.load %arg9[%c0_21, %c0_22] : memref<128x128xf32, #tpu.memory_space<vmem>>, vector<128x128xf32>
    %cst_23 = arith.constant dense<0.000000e+00> : vector<10x128xf32>
    %44 = tpu.matmul %42, %43, %cst_23 {dimension_numbers = #tpu.dot_dimension_numbers<[1], [0], [0], [1], [0, 0, 1, 1], [], []>} : vector<10x128xf32>, vector<128x128xf32>, vector<10x128xf32> -> vector<10x128xf32>
    %c0_24 = arith.constant 0 : index
    %c0_25 = arith.constant 0 : index
    %45 = vector.load %arg17[%c0_24, %c0_25] : memref<10x128xf32, #tpu.memory_space<vmem>>, vector<10x128xf32>
    tpu.vector_store %arg17[%c0_24, %c0_25], %44 {strides = array<i32>} : memref<10x128xf32, #tpu.memory_space<vmem>>, vector<10x128xf32>,
    %c0_26 = arith.constant 0 : index
    %c0_27 = arith.constant 0 : index
    %46 = vector.load %arg10[%c0_26, %c0_27] : memref<128x128xf32, #tpu.memory_space<vmem>>, vector<128x128xf32>
    %cst_28 = arith.constant dense<0.000000e+00> : vector<10x128xf32>
    %47 = tpu.matmul %42, %46, %cst_28 {dimension_numbers = #tpu.dot_dimension_numbers<[1], [0], [0], [1], [0, 0, 1, 1], [], []>} : vector<10x128xf32>, vector<128x128xf32>, vector<10x128xf32> -> vector<10x128xf32>
    %c0_29 = arith.constant 0 : index
    %c0_30 = arith.constant 0 : index
    %48 = vector.load %arg18[%c0_29, %c0_30] : memref<10x128xf32, #tpu.memory_space<vmem>>, vector<10x128xf32>
    tpu.vector_store %arg18[%c0_29, %c0_30], %47 {strides = array<i32>} : memref<10x128xf32, #tpu.memory_space<vmem>>, vector<10x128xf32>,
    %49 = tpu.iota {dimensions = array<i32: 1>} : vector<1x128xi32>
    %c0_31 = arith.constant 0 : index
    %50 = memref.load %arg0[%c0_31] : memref<20xi32, #tpu.memory_space<smem>>
    %c0_32 = arith.constant 0 : index
    %51 = memref.load %arg1[%c0_32] : memref<20xi32, #tpu.memory_space<smem>>
    %c0_33 = arith.constant 0 : index
    %52 = memref.load %arg2[%c0_33] : memref<20xi32, #tpu.memory_space<smem>>
    %53 = arith.index_cast %50 : i32 to index
    %c0_34 = arith.constant 0 : index
    %54 = vector.load %arg17[%53, %c0_34] : memref<10x128xf32, #tpu.memory_space<vmem>>, vector<1x128xf32>
    %55 = arith.index_cast %51 : i32 to index
    %c0_35 = arith.constant 0 : index
    %56 = vector.load %arg18[%55, %c0_35] : memref<10x128xf32, #tpu.memory_space<vmem>>, vector<1x128xf32>
    %57 = arith.addf %54, %56 : vector<1x128xf32>
    %c0_36 = arith.constant 0 : index
    %c0_37 = arith.constant 0 : index
    %58 = vector.load %arg19[%c0_36, %c0_37] : memref<20x128xf32, #tpu.memory_space<vmem>>, vector<1x128xf32>
    tpu.vector_store %arg19[%c0_36, %c0_37], %57 {strides = array<i32>} : memref<20x128xf32, #tpu.memory_space<vmem>>, vector<1x128xf32>,
    %59 = vector.broadcast %52 : i32 to vector<1x128xi32>
    %60 = arith.cmpi eq, %49, %59 : vector<1x128xi32>
    %61 = arith.extui %60 : vector<1x128xi1> to vector<1x128xi32>
    %62 = arith.sitofp %61 : vector<1x128xi32> to vector<1x128xf32>
    %c0_38 = arith.constant 0 : index
    %c0_39 = arith.constant 0 : index
    %63 = vector.load %arg20[%c0_38, %c0_39] : memref<20x128xf32, #tpu.memory_space<vmem>>, vector<1x128xf32>
    tpu.vector_store %arg20[%c0_38, %c0_39], %62 {strides = array<i32>} : memref<20x128xf32, #tpu.memory_space<vmem>>, vector<1x128xf32>,
    %c1 = arith.constant 1 : index
    %64 = memref.load %arg0[%c1] : memref<20xi32, #tpu.memory_space<smem>>
    %c1_40 = arith.constant 1 : index
    %65 = memref.load %arg1[%c1_40] : memref<20xi32, #tpu.memory_space<smem>>
    %c1_41 = arith.constant 1 : index
    %66 = memref.load %arg2[%c1_41] : memref<20xi32, #tpu.memory_space<smem>>
    %67 = arith.index_cast %64 : i32 to index
    %c0_42 = arith.constant 0 : index
    %68 = vector.load %arg17[%67, %c0_42] : memref<10x128xf32, #tpu.memory_space<vmem>>, vector<1x128xf32>
    %69 = arith.index_cast %65 : i32 to index
    %c0_43 = arith.constant 0 : index
    %70 = vector.load %arg18[%69, %c0_43] : memref<10x128xf32, #tpu.memory_space<vmem>>, vector<1x128xf32>
    %71 = arith.addf %68, %70 : vector<1x128xf32>
    %c1_44 = arith.constant 1 : index
    %c0_45 = arith.constant 0 : index
    %72 = vector.load %arg19[%c1_44, %c0_45] : memref<20x128xf32, #tpu.memory_space<vmem>>, vector<1x128xf32>
    tpu.vector_store %arg19[%c1_44, %c0_45], %71 {strides = array<i32>} : memref<20x128xf32, #tpu.memory_space<vmem>>, vector<1x128xf32>,
    %73 = vector.broadcast %66 : i32 to vector<1x128xi32>
    %74 = arith.cmpi eq, %49, %73 : vector<1x128xi32>
    %75 = arith.extui %74 : vector<1x128xi1> to vector<1x128xi32>
    %76 = arith.sitofp %75 : vector<1x128xi32> to vector<1x128xf32>
    %c1_46 = arith.constant 1 : index
    %c0_47 = arith.constant 0 : index
    %77 = vector.load %arg20[%c1_46, %c0_47] : memref<20x128xf32, #tpu.memory_space<vmem>>, vector<1x128xf32>
    tpu.vector_store %arg20[%c1_46, %c0_47], %76 {strides = array<i32>} : memref<20x128xf32, #tpu.memory_space<vmem>>, vector<1x128xf32>,
    %c2 = arith.constant 2 : index
    %78 = memref.load %arg0[%c2] : memref<20xi32, #tpu.memory_space<smem>>
    %c2_48 = arith.constant 2 : index
    %79 = memref.load %arg1[%c2_48] : memref<20xi32, #tpu.memory_space<smem>>
    %c2_49 = arith.constant 2 : index
    %80 = memref.load %arg2[%c2_49] : memref<20xi32, #tpu.memory_space<smem>>
    %81 = arith.index_cast %78 : i32 to index
    %c0_50 = arith.constant 0 : index
    %82 = vector.load %arg17[%81, %c0_50] : memref<10x128xf32, #tpu.memory_space<vmem>>, vector<1x128xf32>
    %83 = arith.index_cast %79 : i32 to index
    %c0_51 = arith.constant 0 : index
    %84 = vector.load %arg18[%83, %c0_51] : memref<10x128xf32, #tpu.memory_space<vmem>>, vector<1x128xf32>
    %85 = arith.addf %82, %84 : vector<1x128xf32>
    %c2_52 = arith.constant 2 : index
    %c0_53 = arith.constant 0 : index
    %86 = vector.load %arg19[%c2_52, %c0_53] : memref<20x128xf32, #tpu.memory_space<vmem>>, vector<1x128xf32>
    tpu.vector_store %arg19[%c2_52, %c0_53], %85 {strides = array<i32>} : memref<20x128xf32, #tpu.memory_space<vmem>>, vector<1x128xf32>,
    %87 = vector.broadcast %80 : i32 to vector<1x128xi32>
    %88 = arith.cmpi eq, %49, %87 : vector<1x128xi32>
    %89 = arith.extui %88 : vector<1x128xi1> to vector<1x128xi32>
    %90 = arith.sitofp %89 : vector<1x128xi32> to vector<1x128xf32>
    %c2_54 = arith.constant 2 : index
    %c0_55 = arith.constant 0 : index
    %91 = vector.load %arg20[%c2_54, %c0_55] : memref<20x128xf32, #tpu.memory_space<vmem>>, vector<1x128xf32>
    tpu.vector_store %arg20[%c2_54, %c0_55], %90 {strides = array<i32>} : memref<20x128xf32, #tpu.memory_space<vmem>>, vector<1x128xf32>,
    %c3 = arith.constant 3 : index
    %92 = memref.load %arg0[%c3] : memref<20xi32, #tpu.memory_space<smem>>
    %c3_56 = arith.constant 3 : index
    %93 = memref.load %arg1[%c3_56] : memref<20xi32, #tpu.memory_space<smem>>
    %c3_57 = arith.constant 3 : index
    %94 = memref.load %arg2[%c3_57] : memref<20xi32, #tpu.memory_space<smem>>
    %95 = arith.index_cast %92 : i32 to index
    %c0_58 = arith.constant 0 : index
    %96 = vector.load %arg17[%95, %c0_58] : memref<10x128xf32, #tpu.memory_space<vmem>>, vector<1x128xf32>
    %97 = arith.index_cast %93 : i32 to index
    %c0_59 = arith.constant 0 : index
    %98 = vector.load %arg18[%97, %c0_59] : memref<10x128xf32, #tpu.memory_space<vmem>>, vector<1x128xf32>
    %99 = arith.addf %96, %98 : vector<1x128xf32>
    %c3_60 = arith.constant 3 : index
    %c0_61 = arith.constant 0 : index
    %100 = vector.load %arg19[%c3_60, %c0_61] : memref<20x128xf32, #tpu.memory_space<vmem>>, vector<1x128xf32>
    tpu.vector_store %arg19[%c3_60, %c0_61], %99 {strides = array<i32>} : memref<20x128xf32, #tpu.memory_space<vmem>>, vector<1x128xf32>,
    %101 = vector.broadcast %94 : i32 to vector<1x128xi32>
    %102 = arith.cmpi eq, %49, %101 : vector<1x128xi32>
    %103 = arith.extui %102 : vector<1x128xi1> to vector<1x128xi32>
    %104 = arith.sitofp %103 : vector<1x128xi32> to vector<1x128xf32>
    %c3_62 = arith.constant 3 : index
    %c0_63 = arith.constant 0 : index
    %105 = vector.load %arg20[%c3_62, %c0_63] : memref<20x128xf32, #tpu.memory_space<vmem>>, vector<1x128xf32>
    tpu.vector_store %arg20[%c3_62, %c0_63], %104 {strides = array<i32>} : memref<20x128xf32, #tpu.memory_space<vmem>>, vector<1x128xf32>,
    %c4 = arith.constant 4 : index
    %106 = memref.load %arg0[%c4] : memref<20xi32, #tpu.memory_space<smem>>
    %c4_64 = arith.constant 4 : index
    %107 = memref.load %arg1[%c4_64] : memref<20xi32, #tpu.memory_space<smem>>
    %c4_65 = arith.constant 4 : index
    %108 = memref.load %arg2[%c4_65] : memref<20xi32, #tpu.memory_space<smem>>
    %109 = arith.index_cast %106 : i32 to index
    %c0_66 = arith.constant 0 : index
    %110 = vector.load %arg17[%109, %c0_66] : memref<10x128xf32, #tpu.memory_space<vmem>>, vector<1x128xf32>
    %111 = arith.index_cast %107 : i32 to index
    %c0_67 = arith.constant 0 : index
    %112 = vector.load %arg18[%111, %c0_67] : memref<10x128xf32, #tpu.memory_space<vmem>>, vector<1x128xf32>
    %113 = arith.addf %110, %112 : vector<1x128xf32>
    %c4_68 = arith.constant 4 : index
    %c0_69 = arith.constant 0 : index
    %114 = vector.load %arg19[%c4_68, %c0_69] : memref<20x128xf32, #tpu.memory_space<vmem>>, vector<1x128xf32>
    tpu.vector_store %arg19[%c4_68, %c0_69], %113 {strides = array<i32>} : memref<20x128xf32, #tpu.memory_space<vmem>>, vector<1x128xf32>,
    %115 = vector.broadcast %108 : i32 to vector<1x128xi32>
    %116 = arith.cmpi eq, %49, %115 : vector<1x128xi32>
    %117 = arith.extui %116 : vector<1x128xi1> to vector<1x128xi32>
    %118 = arith.sitofp %117 : vector<1x128xi32> to vector<1x128xf32>
    %c4_70 = arith.constant 4 : index
    %c0_71 = arith.constant 0 : index
    %119 = vector.load %arg20[%c4_70, %c0_71] : memref<20x128xf32, #tpu.memory_space<vmem>>, vector<1x128xf32>
    tpu.vector_store %arg20[%c4_70, %c0_71], %118 {strides = array<i32>} : memref<20x128xf32, #tpu.memory_space<vmem>>, vector<1x128xf32>,
    %c5 = arith.constant 5 : index
    %120 = memref.load %arg0[%c5] : memref<20xi32, #tpu.memory_space<smem>>
    %c5_72 = arith.constant 5 : index
    %121 = memref.load %arg1[%c5_72] : memref<20xi32, #tpu.memory_space<smem>>
    %c5_73 = arith.constant 5 : index
    %122 = memref.load %arg2[%c5_73] : memref<20xi32, #tpu.memory_space<smem>>
    %123 = arith.index_cast %120 : i32 to index
    %c0_74 = arith.constant 0 : index
    %124 = vector.load %arg17[%123, %c0_74] : memref<10x128xf32, #tpu.memory_space<vmem>>, vector<1x128xf32>
    %125 = arith.index_cast %121 : i32 to index
    %c0_75 = arith.constant 0 : index
    %126 = vector.load %arg18[%125, %c0_75] : memref<10x128xf32, #tpu.memory_space<vmem>>, vector<1x128xf32>
    %127 = arith.addf %124, %126 : vector<1x128xf32>
    %c5_76 = arith.constant 5 : index
    %c0_77 = arith.constant 0 : index
    %128 = vector.load %arg19[%c5_76, %c0_77] : memref<20x128xf32, #tpu.memory_space<vmem>>, vector<1x128xf32>
    tpu.vector_store %arg19[%c5_76, %c0_77], %127 {strides = array<i32>} : memref<20x128xf32, #tpu.memory_space<vmem>>, vector<1x128xf32>,
    %129 = vector.broadcast %122 : i32 to vector<1x128xi32>
    %130 = arith.cmpi eq, %49, %129 : vector<1x128xi32>
    %131 = arith.extui %130 : vector<1x128xi1> to vector<1x128xi32>
    %132 = arith.sitofp %131 : vector<1x128xi32> to vector<1x128xf32>
    %c5_78 = arith.constant 5 : index
    %c0_79 = arith.constant 0 : index
    %133 = vector.load %arg20[%c5_78, %c0_79] : memref<20x128xf32, #tpu.memory_space<vmem>>, vector<1x128xf32>
    tpu.vector_store %arg20[%c5_78, %c0_79], %132 {strides = array<i32>} : memref<20x128xf32, #tpu.memory_space<vmem>>, vector<1x128xf32>,
    %c6 = arith.constant 6 : index
    %134 = memref.load %arg0[%c6] : memref<20xi32, #tpu.memory_space<smem>>
    %c6_80 = arith.constant 6 : index
    %135 = memref.load %arg1[%c6_80] : memref<20xi32, #tpu.memory_space<smem>>
    %c6_81 = arith.constant 6 : index
    %136 = memref.load %arg2[%c6_81] : memref<20xi32, #tpu.memory_space<smem>>
    %137 = arith.index_cast %134 : i32 to index
    %c0_82 = arith.constant 0 : index
    %138 = vector.load %arg17[%137, %c0_82] : memref<10x128xf32, #tpu.memory_space<vmem>>, vector<1x128xf32>
    %139 = arith.index_cast %135 : i32 to index
    %c0_83 = arith.constant 0 : index
    %140 = vector.load %arg18[%139, %c0_83] : memref<10x128xf32, #tpu.memory_space<vmem>>, vector<1x128xf32>
    %141 = arith.addf %138, %140 : vector<1x128xf32>
    %c6_84 = arith.constant 6 : index
    %c0_85 = arith.constant 0 : index
    %142 = vector.load %arg19[%c6_84, %c0_85] : memref<20x128xf32, #tpu.memory_space<vmem>>, vector<1x128xf32>
    tpu.vector_store %arg19[%c6_84, %c0_85], %141 {strides = array<i32>} : memref<20x128xf32, #tpu.memory_space<vmem>>, vector<1x128xf32>,
    %143 = vector.broadcast %136 : i32 to vector<1x128xi32>
    %144 = arith.cmpi eq, %49, %143 : vector<1x128xi32>
    %145 = arith.extui %144 : vector<1x128xi1> to vector<1x128xi32>
    %146 = arith.sitofp %145 : vector<1x128xi32> to vector<1x128xf32>
    %c6_86 = arith.constant 6 : index
    %c0_87 = arith.constant 0 : index
    %147 = vector.load %arg20[%c6_86, %c0_87] : memref<20x128xf32, #tpu.memory_space<vmem>>, vector<1x128xf32>
    tpu.vector_store %arg20[%c6_86, %c0_87], %146 {strides = array<i32>} : memref<20x128xf32, #tpu.memory_space<vmem>>, vector<1x128xf32>,
    %c7 = arith.constant 7 : index
    %148 = memref.load %arg0[%c7] : memref<20xi32, #tpu.memory_space<smem>>
    %c7_88 = arith.constant 7 : index
    %149 = memref.load %arg1[%c7_88] : memref<20xi32, #tpu.memory_space<smem>>
    %c7_89 = arith.constant 7 : index
    %150 = memref.load %arg2[%c7_89] : memref<20xi32, #tpu.memory_space<smem>>
    %151 = arith.index_cast %148 : i32 to index
    %c0_90 = arith.constant 0 : index
    %152 = vector.load %arg17[%151, %c0_90] : memref<10x128xf32, #tpu.memory_space<vmem>>, vector<1x128xf32>
    %153 = arith.index_cast %149 : i32 to index
    %c0_91 = arith.constant 0 : index
    %154 = vector.load %arg18[%153, %c0_91] : memref<10x128xf32, #tpu.memory_space<vmem>>, vector<1x128xf32>
    %155 = arith.addf %152, %154 : vector<1x128xf32>
    %c7_92 = arith.constant 7 : index
    %c0_93 = arith.constant 0 : index
    %156 = vector.load %arg19[%c7_92, %c0_93] : memref<20x128xf32, #tpu.memory_space<vmem>>, vector<1x128xf32>
    tpu.vector_store %arg19[%c7_92, %c0_93], %155 {strides = array<i32>} : memref<20x128xf32, #tpu.memory_space<vmem>>, vector<1x128xf32>,
    %157 = vector.broadcast %150 : i32 to vector<1x128xi32>
    %158 = arith.cmpi eq, %49, %157 : vector<1x128xi32>
    %159 = arith.extui %158 : vector<1x128xi1> to vector<1x128xi32>
    %160 = arith.sitofp %159 : vector<1x128xi32> to vector<1x128xf32>
    %c7_94 = arith.constant 7 : index
    %c0_95 = arith.constant 0 : index
    %161 = vector.load %arg20[%c7_94, %c0_95] : memref<20x128xf32, #tpu.memory_space<vmem>>, vector<1x128xf32>
    tpu.vector_store %arg20[%c7_94, %c0_95], %160 {strides = array<i32>} : memref<20x128xf32, #tpu.memory_space<vmem>>, vector<1x128xf32>,
    %c8 = arith.constant 8 : index
    %162 = memref.load %arg0[%c8] : memref<20xi32, #tpu.memory_space<smem>>
    %c8_96 = arith.constant 8 : index
    %163 = memref.load %arg1[%c8_96] : memref<20xi32, #tpu.memory_space<smem>>
    %c8_97 = arith.constant 8 : index
    %164 = memref.load %arg2[%c8_97] : memref<20xi32, #tpu.memory_space<smem>>
    %165 = arith.index_cast %162 : i32 to index
    %c0_98 = arith.constant 0 : index
    %166 = vector.load %arg17[%165, %c0_98] : memref<10x128xf32, #tpu.memory_space<vmem>>, vector<1x128xf32>
    %167 = arith.index_cast %163 : i32 to index
    %c0_99 = arith.constant 0 : index
    %168 = vector.load %arg18[%167, %c0_99] : memref<10x128xf32, #tpu.memory_space<vmem>>, vector<1x128xf32>
    %169 = arith.addf %166, %168 : vector<1x128xf32>
    %c8_100 = arith.constant 8 : index
    %c0_101 = arith.constant 0 : index
    %170 = vector.load %arg19[%c8_100, %c0_101] : memref<20x128xf32, #tpu.memory_space<vmem>>, vector<1x128xf32>
    tpu.vector_store %arg19[%c8_100, %c0_101], %169 {strides = array<i32>} : memref<20x128xf32, #tpu.memory_space<vmem>>, vector<1x128xf32>,
    %171 = vector.broadcast %164 : i32 to vector<1x128xi32>
    %172 = arith.cmpi eq, %49, %171 : vector<1x128xi32>
    %173 = arith.extui %172 : vector<1x128xi1> to vector<1x128xi32>
    %174 = arith.sitofp %173 : vector<1x128xi32> to vector<1x128xf32>
    %c8_102 = arith.constant 8 : index
    %c0_103 = arith.constant 0 : index
    %175 = vector.load %arg20[%c8_102, %c0_103] : memref<20x128xf32, #tpu.memory_space<vmem>>, vector<1x128xf32>
    tpu.vector_store %arg20[%c8_102, %c0_103], %174 {strides = array<i32>} : memref<20x128xf32, #tpu.memory_space<vmem>>, vector<1x128xf32>,
    %c9 = arith.constant 9 : index
    %176 = memref.load %arg0[%c9] : memref<20xi32, #tpu.memory_space<smem>>
    %c9_104 = arith.constant 9 : index
    %177 = memref.load %arg1[%c9_104] : memref<20xi32, #tpu.memory_space<smem>>
    %c9_105 = arith.constant 9 : index
    %178 = memref.load %arg2[%c9_105] : memref<20xi32, #tpu.memory_space<smem>>
    %179 = arith.index_cast %176 : i32 to index
    %c0_106 = arith.constant 0 : index
    %180 = vector.load %arg17[%179, %c0_106] : memref<10x128xf32, #tpu.memory_space<vmem>>, vector<1x128xf32>
    %181 = arith.index_cast %177 : i32 to index
    %c0_107 = arith.constant 0 : index
    %182 = vector.load %arg18[%181, %c0_107] : memref<10x128xf32, #tpu.memory_space<vmem>>, vector<1x128xf32>
    %183 = arith.addf %180, %182 : vector<1x128xf32>
    %c9_108 = arith.constant 9 : index
    %c0_109 = arith.constant 0 : index
    %184 = vector.load %arg19[%c9_108, %c0_109] : memref<20x128xf32, #tpu.memory_space<vmem>>, vector<1x128xf32>
    tpu.vector_store %arg19[%c9_108, %c0_109], %183 {strides = array<i32>} : memref<20x128xf32, #tpu.memory_space<vmem>>, vector<1x128xf32>,
    %185 = vector.broadcast %178 : i32 to vector<1x128xi32>
    %186 = arith.cmpi eq, %49, %185 : vector<1x128xi32>
    %187 = arith.extui %186 : vector<1x128xi1> to vector<1x128xi32>
    %188 = arith.sitofp %187 : vector<1x128xi32> to vector<1x128xf32>
    %c9_110 = arith.constant 9 : index
    %c0_111 = arith.constant 0 : index
    %189 = vector.load %arg20[%c9_110, %c0_111] : memref<20x128xf32, #tpu.memory_space<vmem>>, vector<1x128xf32>
    tpu.vector_store %arg20[%c9_110, %c0_111], %188 {strides = array<i32>} : memref<20x128xf32, #tpu.memory_space<vmem>>, vector<1x128xf32>,
    %c10 = arith.constant 10 : index
    %190 = memref.load %arg0[%c10] : memref<20xi32, #tpu.memory_space<smem>>
    %c10_112 = arith.constant 10 : index
    %191 = memref.load %arg1[%c10_112] : memref<20xi32, #tpu.memory_space<smem>>
    %c10_113 = arith.constant 10 : index
    %192 = memref.load %arg2[%c10_113] : memref<20xi32, #tpu.memory_space<smem>>
    %193 = arith.index_cast %190 : i32 to index
    %c0_114 = arith.constant 0 : index
    %194 = vector.load %arg17[%193, %c0_114] : memref<10x128xf32, #tpu.memory_space<vmem>>, vector<1x128xf32>
    %195 = arith.index_cast %191 : i32 to index
    %c0_115 = arith.constant 0 : index
    %196 = vector.load %arg18[%195, %c0_115] : memref<10x128xf32, #tpu.memory_space<vmem>>, vector<1x128xf32>
    %197 = arith.addf %194, %196 : vector<1x128xf32>
    %c10_116 = arith.constant 10 : index
    %c0_117 = arith.constant 0 : index
    %198 = vector.load %arg19[%c10_116, %c0_117] : memref<20x128xf32, #tpu.memory_space<vmem>>, vector<1x128xf32>
    tpu.vector_store %arg19[%c10_116, %c0_117], %197 {strides = array<i32>} : memref<20x128xf32, #tpu.memory_space<vmem>>, vector<1x128xf32>,
    %199 = vector.broadcast %192 : i32 to vector<1x128xi32>
    %200 = arith.cmpi eq, %49, %199 : vector<1x128xi32>
    %201 = arith.extui %200 : vector<1x128xi1> to vector<1x128xi32>
    %202 = arith.sitofp %201 : vector<1x128xi32> to vector<1x128xf32>
    %c10_118 = arith.constant 10 : index
    %c0_119 = arith.constant 0 : index
    %203 = vector.load %arg20[%c10_118, %c0_119] : memref<20x128xf32, #tpu.memory_space<vmem>>, vector<1x128xf32>
    tpu.vector_store %arg20[%c10_118, %c0_119], %202 {strides = array<i32>} : memref<20x128xf32, #tpu.memory_space<vmem>>, vector<1x128xf32>,
    %c11 = arith.constant 11 : index
    %204 = memref.load %arg0[%c11] : memref<20xi32, #tpu.memory_space<smem>>
    %c11_120 = arith.constant 11 : index
    %205 = memref.load %arg1[%c11_120] : memref<20xi32, #tpu.memory_space<smem>>
    %c11_121 = arith.constant 11 : index
    %206 = memref.load %arg2[%c11_121] : memref<20xi32, #tpu.memory_space<smem>>
    %207 = arith.index_cast %204 : i32 to index
    %c0_122 = arith.constant 0 : index
    %208 = vector.load %arg17[%207, %c0_122] : memref<10x128xf32, #tpu.memory_space<vmem>>, vector<1x128xf32>
    %209 = arith.index_cast %205 : i32 to index
    %c0_123 = arith.constant 0 : index
    %210 = vector.load %arg18[%209, %c0_123] : memref<10x128xf32, #tpu.memory_space<vmem>>, vector<1x128xf32>
    %211 = arith.addf %208, %210 : vector<1x128xf32>
    %c11_124 = arith.constant 11 : index
    %c0_125 = arith.constant 0 : index
    %212 = vector.load %arg19[%c11_124, %c0_125] : memref<20x128xf32, #tpu.memory_space<vmem>>, vector<1x128xf32>
    tpu.vector_store %arg19[%c11_124, %c0_125], %211 {strides = array<i32>} : memref<20x128xf32, #tpu.memory_space<vmem>>, vector<1x128xf32>,
    %213 = vector.broadcast %206 : i32 to vector<1x128xi32>
    %214 = arith.cmpi eq, %49, %213 : vector<1x128xi32>
    %215 = arith.extui %214 : vector<1x128xi1> to vector<1x128xi32>
    %216 = arith.sitofp %215 : vector<1x128xi32> to vector<1x128xf32>
    %c11_126 = arith.constant 11 : index
    %c0_127 = arith.constant 0 : index
    %217 = vector.load %arg20[%c11_126, %c0_127] : memref<20x128xf32, #tpu.memory_space<vmem>>, vector<1x128xf32>
    tpu.vector_store %arg20[%c11_126, %c0_127], %216 {strides = array<i32>} : memref<20x128xf32, #tpu.memory_space<vmem>>, vector<1x128xf32>,
    %c12 = arith.constant 12 : index
    %218 = memref.load %arg0[%c12] : memref<20xi32, #tpu.memory_space<smem>>
    %c12_128 = arith.constant 12 : index
    %219 = memref.load %arg1[%c12_128] : memref<20xi32, #tpu.memory_space<smem>>
    %c12_129 = arith.constant 12 : index
    %220 = memref.load %arg2[%c12_129] : memref<20xi32, #tpu.memory_space<smem>>
    %221 = arith.index_cast %218 : i32 to index
    %c0_130 = arith.constant 0 : index
    %222 = vector.load %arg17[%221, %c0_130] : memref<10x128xf32, #tpu.memory_space<vmem>>, vector<1x128xf32>
    %223 = arith.index_cast %219 : i32 to index
    %c0_131 = arith.constant 0 : index
    %224 = vector.load %arg18[%223, %c0_131] : memref<10x128xf32, #tpu.memory_space<vmem>>, vector<1x128xf32>
    %225 = arith.addf %222, %224 : vector<1x128xf32>
    %c12_132 = arith.constant 12 : index
    %c0_133 = arith.constant 0 : index
    %226 = vector.load %arg19[%c12_132, %c0_133] : memref<20x128xf32, #tpu.memory_space<vmem>>, vector<1x128xf32>
    tpu.vector_store %arg19[%c12_132, %c0_133], %225 {strides = array<i32>} : memref<20x128xf32, #tpu.memory_space<vmem>>, vector<1x128xf32>,
    %227 = vector.broadcast %220 : i32 to vector<1x128xi32>
    %228 = arith.cmpi eq, %49, %227 : vector<1x128xi32>
    %229 = arith.extui %228 : vector<1x128xi1> to vector<1x128xi32>
    %230 = arith.sitofp %229 : vector<1x128xi32> to vector<1x128xf32>
    %c12_134 = arith.constant 12 : index
    %c0_135 = arith.constant 0 : index
    %231 = vector.load %arg20[%c12_134, %c0_135] : memref<20x128xf32, #tpu.memory_space<vmem>>, vector<1x128xf32>
    tpu.vector_store %arg20[%c12_134, %c0_135], %230 {strides = array<i32>} : memref<20x128xf32, #tpu.memory_space<vmem>>, vector<1x128xf32>,
    %c13 = arith.constant 13 : index
    %232 = memref.load %arg0[%c13] : memref<20xi32, #tpu.memory_space<smem>>
    %c13_136 = arith.constant 13 : index
    %233 = memref.load %arg1[%c13_136] : memref<20xi32, #tpu.memory_space<smem>>
    %c13_137 = arith.constant 13 : index
    %234 = memref.load %arg2[%c13_137] : memref<20xi32, #tpu.memory_space<smem>>
    %235 = arith.index_cast %232 : i32 to index
    %c0_138 = arith.constant 0 : index
    %236 = vector.load %arg17[%235, %c0_138] : memref<10x128xf32, #tpu.memory_space<vmem>>, vector<1x128xf32>
    %237 = arith.index_cast %233 : i32 to index
    %c0_139 = arith.constant 0 : index
    %238 = vector.load %arg18[%237, %c0_139] : memref<10x128xf32, #tpu.memory_space<vmem>>, vector<1x128xf32>
    %239 = arith.addf %236, %238 : vector<1x128xf32>
    %c13_140 = arith.constant 13 : index
    %c0_141 = arith.constant 0 : index
    %240 = vector.load %arg19[%c13_140, %c0_141] : memref<20x128xf32, #tpu.memory_space<vmem>>, vector<1x128xf32>
    tpu.vector_store %arg19[%c13_140, %c0_141], %239 {strides = array<i32>} : memref<20x128xf32, #tpu.memory_space<vmem>>, vector<1x128xf32>,
    %241 = vector.broadcast %234 : i32 to vector<1x128xi32>
    %242 = arith.cmpi eq, %49, %241 : vector<1x128xi32>
    %243 = arith.extui %242 : vector<1x128xi1> to vector<1x128xi32>
    %244 = arith.sitofp %243 : vector<1x128xi32> to vector<1x128xf32>
    %c13_142 = arith.constant 13 : index
    %c0_143 = arith.constant 0 : index
    %245 = vector.load %arg20[%c13_142, %c0_143] : memref<20x128xf32, #tpu.memory_space<vmem>>, vector<1x128xf32>
    tpu.vector_store %arg20[%c13_142, %c0_143], %244 {strides = array<i32>} : memref<20x128xf32, #tpu.memory_space<vmem>>, vector<1x128xf32>,
    %c14 = arith.constant 14 : index
    %246 = memref.load %arg0[%c14] : memref<20xi32, #tpu.memory_space<smem>>
    %c14_144 = arith.constant 14 : index
    %247 = memref.load %arg1[%c14_144] : memref<20xi32, #tpu.memory_space<smem>>
    %c14_145 = arith.constant 14 : index
    %248 = memref.load %arg2[%c14_145] : memref<20xi32, #tpu.memory_space<smem>>
    %249 = arith.index_cast %246 : i32 to index
    %c0_146 = arith.constant 0 : index
    %250 = vector.load %arg17[%249, %c0_146] : memref<10x128xf32, #tpu.memory_space<vmem>>, vector<1x128xf32>
    %251 = arith.index_cast %247 : i32 to index
    %c0_147 = arith.constant 0 : index
    %252 = vector.load %arg18[%251, %c0_147] : memref<10x128xf32, #tpu.memory_space<vmem>>, vector<1x128xf32>
    %253 = arith.addf %250, %252 : vector<1x128xf32>
    %c14_148 = arith.constant 14 : index
    %c0_149 = arith.constant 0 : index
    %254 = vector.load %arg19[%c14_148, %c0_149] : memref<20x128xf32, #tpu.memory_space<vmem>>, vector<1x128xf32>
    tpu.vector_store %arg19[%c14_148, %c0_149], %253 {strides = array<i32>} : memref<20x128xf32, #tpu.memory_space<vmem>>, vector<1x128xf32>,
    %255 = vector.broadcast %248 : i32 to vector<1x128xi32>
    %256 = arith.cmpi eq, %49, %255 : vector<1x128xi32>
    %257 = arith.extui %256 : vector<1x128xi1> to vector<1x128xi32>
    %258 = arith.sitofp %257 : vector<1x128xi32> to vector<1x128xf32>
    %c14_150 = arith.constant 14 : index
    %c0_151 = arith.constant 0 : index
    %259 = vector.load %arg20[%c14_150, %c0_151] : memref<20x128xf32, #tpu.memory_space<vmem>>, vector<1x128xf32>
    tpu.vector_store %arg20[%c14_150, %c0_151], %258 {strides = array<i32>} : memref<20x128xf32, #tpu.memory_space<vmem>>, vector<1x128xf32>,
    %c15 = arith.constant 15 : index
    %260 = memref.load %arg0[%c15] : memref<20xi32, #tpu.memory_space<smem>>
    %c15_152 = arith.constant 15 : index
    %261 = memref.load %arg1[%c15_152] : memref<20xi32, #tpu.memory_space<smem>>
    %c15_153 = arith.constant 15 : index
    %262 = memref.load %arg2[%c15_153] : memref<20xi32, #tpu.memory_space<smem>>
    %263 = arith.index_cast %260 : i32 to index
    %c0_154 = arith.constant 0 : index
    %264 = vector.load %arg17[%263, %c0_154] : memref<10x128xf32, #tpu.memory_space<vmem>>, vector<1x128xf32>
    %265 = arith.index_cast %261 : i32 to index
    %c0_155 = arith.constant 0 : index
    %266 = vector.load %arg18[%265, %c0_155] : memref<10x128xf32, #tpu.memory_space<vmem>>, vector<1x128xf32>
    %267 = arith.addf %264, %266 : vector<1x128xf32>
    %c15_156 = arith.constant 15 : index
    %c0_157 = arith.constant 0 : index
    %268 = vector.load %arg19[%c15_156, %c0_157] : memref<20x128xf32, #tpu.memory_space<vmem>>, vector<1x128xf32>
    tpu.vector_store %arg19[%c15_156, %c0_157], %267 {strides = array<i32>} : memref<20x128xf32, #tpu.memory_space<vmem>>, vector<1x128xf32>,
    %269 = vector.broadcast %262 : i32 to vector<1x128xi32>
    %270 = arith.cmpi eq, %49, %269 : vector<1x128xi32>
    %271 = arith.extui %270 : vector<1x128xi1> to vector<1x128xi32>
    %272 = arith.sitofp %271 : vector<1x128xi32> to vector<1x128xf32>
    %c15_158 = arith.constant 15 : index
    %c0_159 = arith.constant 0 : index
    %273 = vector.load %arg20[%c15_158, %c0_159] : memref<20x128xf32, #tpu.memory_space<vmem>>, vector<1x128xf32>
    tpu.vector_store %arg20[%c15_158, %c0_159], %272 {strides = array<i32>} : memref<20x128xf32, #tpu.memory_space<vmem>>, vector<1x128xf32>,
    %c16 = arith.constant 16 : index
    %274 = memref.load %arg0[%c16] : memref<20xi32, #tpu.memory_space<smem>>
    %c16_160 = arith.constant 16 : index
    %275 = memref.load %arg1[%c16_160] : memref<20xi32, #tpu.memory_space<smem>>
    %c16_161 = arith.constant 16 : index
    %276 = memref.load %arg2[%c16_161] : memref<20xi32, #tpu.memory_space<smem>>
    %277 = arith.index_cast %274 : i32 to index
    %c0_162 = arith.constant 0 : index
    %278 = vector.load %arg17[%277, %c0_162] : memref<10x128xf32, #tpu.memory_space<vmem>>, vector<1x128xf32>
    %279 = arith.index_cast %275 : i32 to index
    %c0_163 = arith.constant 0 : index
    %280 = vector.load %arg18[%279, %c0_163] : memref<10x128xf32, #tpu.memory_space<vmem>>, vector<1x128xf32>
    %281 = arith.addf %278, %280 : vector<1x128xf32>
    %c16_164 = arith.constant 16 : index
    %c0_165 = arith.constant 0 : index
    %282 = vector.load %arg19[%c16_164, %c0_165] : memref<20x128xf32, #tpu.memory_space<vmem>>, vector<1x128xf32>
    tpu.vector_store %arg19[%c16_164, %c0_165], %281 {strides = array<i32>} : memref<20x128xf32, #tpu.memory_space<vmem>>, vector<1x128xf32>,
    %283 = vector.broadcast %276 : i32 to vector<1x128xi32>
    %284 = arith.cmpi eq, %49, %283 : vector<1x128xi32>
    %285 = arith.extui %284 : vector<1x128xi1> to vector<1x128xi32>
    %286 = arith.sitofp %285 : vector<1x128xi32> to vector<1x128xf32>
    %c16_166 = arith.constant 16 : index
    %c0_167 = arith.constant 0 : index
    %287 = vector.load %arg20[%c16_166, %c0_167] : memref<20x128xf32, #tpu.memory_space<vmem>>, vector<1x128xf32>
    tpu.vector_store %arg20[%c16_166, %c0_167], %286 {strides = array<i32>} : memref<20x128xf32, #tpu.memory_space<vmem>>, vector<1x128xf32>,
    %c17 = arith.constant 17 : index
    %288 = memref.load %arg0[%c17] : memref<20xi32, #tpu.memory_space<smem>>
    %c17_168 = arith.constant 17 : index
    %289 = memref.load %arg1[%c17_168] : memref<20xi32, #tpu.memory_space<smem>>
    %c17_169 = arith.constant 17 : index
    %290 = memref.load %arg2[%c17_169] : memref<20xi32, #tpu.memory_space<smem>>
    %291 = arith.index_cast %288 : i32 to index
    %c0_170 = arith.constant 0 : index
    %292 = vector.load %arg17[%291, %c0_170] : memref<10x128xf32, #tpu.memory_space<vmem>>, vector<1x128xf32>
    %293 = arith.index_cast %289 : i32 to index
    %c0_171 = arith.constant 0 : index
    %294 = vector.load %arg18[%293, %c0_171] : memref<10x128xf32, #tpu.memory_space<vmem>>, vector<1x128xf32>
    %295 = arith.addf %292, %294 : vector<1x128xf32>
    %c17_172 = arith.constant 17 : index
    %c0_173 = arith.constant 0 : index
    %296 = vector.load %arg19[%c17_172, %c0_173] : memref<20x128xf32, #tpu.memory_space<vmem>>, vector<1x128xf32>
    tpu.vector_store %arg19[%c17_172, %c0_173], %295 {strides = array<i32>} : memref<20x128xf32, #tpu.memory_space<vmem>>, vector<1x128xf32>,
    %297 = vector.broadcast %290 : i32 to vector<1x128xi32>
    %298 = arith.cmpi eq, %49, %297 : vector<1x128xi32>
    %299 = arith.extui %298 : vector<1x128xi1> to vector<1x128xi32>
    %300 = arith.sitofp %299 : vector<1x128xi32> to vector<1x128xf32>
    %c17_174 = arith.constant 17 : index
    %c0_175 = arith.constant 0 : index
    %301 = vector.load %arg20[%c17_174, %c0_175] : memref<20x128xf32, #tpu.memory_space<vmem>>, vector<1x128xf32>
    tpu.vector_store %arg20[%c17_174, %c0_175], %300 {strides = array<i32>} : memref<20x128xf32, #tpu.memory_space<vmem>>, vector<1x128xf32>,
    %c18 = arith.constant 18 : index
    %302 = memref.load %arg0[%c18] : memref<20xi32, #tpu.memory_space<smem>>
    %c18_176 = arith.constant 18 : index
    %303 = memref.load %arg1[%c18_176] : memref<20xi32, #tpu.memory_space<smem>>
    %c18_177 = arith.constant 18 : index
    %304 = memref.load %arg2[%c18_177] : memref<20xi32, #tpu.memory_space<smem>>
    %305 = arith.index_cast %302 : i32 to index
    %c0_178 = arith.constant 0 : index
    %306 = vector.load %arg17[%305, %c0_178] : memref<10x128xf32, #tpu.memory_space<vmem>>, vector<1x128xf32>
    %307 = arith.index_cast %303 : i32 to index
    %c0_179 = arith.constant 0 : index
    %308 = vector.load %arg18[%307, %c0_179] : memref<10x128xf32, #tpu.memory_space<vmem>>, vector<1x128xf32>
    %309 = arith.addf %306, %308 : vector<1x128xf32>
    %c18_180 = arith.constant 18 : index
    %c0_181 = arith.constant 0 : index
    %310 = vector.load %arg19[%c18_180, %c0_181] : memref<20x128xf32, #tpu.memory_space<vmem>>, vector<1x128xf32>
    tpu.vector_store %arg19[%c18_180, %c0_181], %309 {strides = array<i32>} : memref<20x128xf32, #tpu.memory_space<vmem>>, vector<1x128xf32>,
    %311 = vector.broadcast %304 : i32 to vector<1x128xi32>
    %312 = arith.cmpi eq, %49, %311 : vector<1x128xi32>
    %313 = arith.extui %312 : vector<1x128xi1> to vector<1x128xi32>
    %314 = arith.sitofp %313 : vector<1x128xi32> to vector<1x128xf32>
    %c18_182 = arith.constant 18 : index
    %c0_183 = arith.constant 0 : index
    %315 = vector.load %arg20[%c18_182, %c0_183] : memref<20x128xf32, #tpu.memory_space<vmem>>, vector<1x128xf32>
    tpu.vector_store %arg20[%c18_182, %c0_183], %314 {strides = array<i32>} : memref<20x128xf32, #tpu.memory_space<vmem>>, vector<1x128xf32>,
    %c19 = arith.constant 19 : index
    %316 = memref.load %arg0[%c19] : memref<20xi32, #tpu.memory_space<smem>>
    %c19_184 = arith.constant 19 : index
    %317 = memref.load %arg1[%c19_184] : memref<20xi32, #tpu.memory_space<smem>>
    %c19_185 = arith.constant 19 : index
    %318 = memref.load %arg2[%c19_185] : memref<20xi32, #tpu.memory_space<smem>>
    %319 = arith.index_cast %316 : i32 to index
    %c0_186 = arith.constant 0 : index
    %320 = vector.load %arg17[%319, %c0_186] : memref<10x128xf32, #tpu.memory_space<vmem>>, vector<1x128xf32>
    %321 = arith.index_cast %317 : i32 to index
    %c0_187 = arith.constant 0 : index
    %322 = vector.load %arg18[%321, %c0_187] : memref<10x128xf32, #tpu.memory_space<vmem>>, vector<1x128xf32>
    %323 = arith.addf %320, %322 : vector<1x128xf32>
    %c19_188 = arith.constant 19 : index
    %c0_189 = arith.constant 0 : index
    %324 = vector.load %arg19[%c19_188, %c0_189] : memref<20x128xf32, #tpu.memory_space<vmem>>, vector<1x128xf32>
    tpu.vector_store %arg19[%c19_188, %c0_189], %323 {strides = array<i32>} : memref<20x128xf32, #tpu.memory_space<vmem>>, vector<1x128xf32>,
    %325 = vector.broadcast %318 : i32 to vector<1x128xi32>
    %326 = arith.cmpi eq, %49, %325 : vector<1x128xi32>
    %327 = arith.extui %326 : vector<1x128xi1> to vector<1x128xi32>
    %328 = arith.sitofp %327 : vector<1x128xi32> to vector<1x128xf32>
    %c19_190 = arith.constant 19 : index
    %c0_191 = arith.constant 0 : index
    %329 = vector.load %arg20[%c19_190, %c0_191] : memref<20x128xf32, #tpu.memory_space<vmem>>, vector<1x128xf32>
    tpu.vector_store %arg20[%c19_190, %c0_191], %328 {strides = array<i32>} : memref<20x128xf32, #tpu.memory_space<vmem>>, vector<1x128xf32>,
    %c0_192 = arith.constant 0 : index
    %c0_193 = arith.constant 0 : index
    %330 = vector.load %arg19[%c0_192, %c0_193] : memref<20x128xf32, #tpu.memory_space<vmem>>, vector<20x128xf32>
    %c0_194 = arith.constant 0 : index
    %c0_195 = arith.constant 0 : index
    %331 = vector.load %arg11[%c0_194, %c0_195] : memref<1x128xf32, #tpu.memory_space<vmem>>, vector<1x128xf32>
    %332 = vector.broadcast %331 : vector<1x128xf32> to vector<20x128xf32>
    %333 = arith.addf %330, %332 : vector<20x128xf32>
    %cst_196 = arith.constant 5.000000e-01 : f32
    %334 = vector.broadcast %cst_196 : f32 to vector<20x128xf32>
    %335 = arith.mulf %334, %333 : vector<20x128xf32>
    %cst_197 = arith.constant 4.471500e-02 : f32
    %336 = vector.broadcast %cst_197 : f32 to vector<20x128xf32>
    %337 = arith.mulf %336, %333 : vector<20x128xf32>
    %338 = arith.mulf %337, %333 : vector<20x128xf32>
    %339 = arith.mulf %338, %333 : vector<20x128xf32>
    %340 = arith.addf %333, %339 : vector<20x128xf32>
    %cst_198 = arith.constant 0.797884583 : f32
    %341 = vector.broadcast %cst_198 : f32 to vector<20x128xf32>
    %342 = arith.mulf %341, %340 : vector<20x128xf32>
    %343 = math.tanh %342 : vector<20x128xf32>
    %cst_199 = arith.constant 1.000000e+00 : f32
    %344 = vector.broadcast %cst_199 : f32 to vector<20x128xf32>
    %345 = arith.addf %344, %343 : vector<20x128xf32>
    %346 = arith.mulf %335, %345 : vector<20x128xf32>
    %c0_200 = arith.constant 0 : index
    %c0_201 = arith.constant 0 : index
    %347 = vector.load %arg12[%c0_200, %c0_201] : memref<128x128xf32, #tpu.memory_space<vmem>>, vector<128x128xf32>
    %cst_202 = arith.constant dense<0.000000e+00> : vector<20x128xf32>
    %348 = tpu.matmul %346, %347, %cst_202 {dimension_numbers = #tpu.dot_dimension_numbers<[1], [0], [0], [1], [0, 0, 1, 1], [], []>} : vector<20x128xf32>, vector<128x128xf32>, vector<20x128xf32> -> vector<20x128xf32>
    %c0_203 = arith.constant 0 : index
    %c0_204 = arith.constant 0 : index
    %349 = vector.load %arg13[%c0_203, %c0_204] : memref<1x128xf32, #tpu.memory_space<vmem>>, vector<1x128xf32>
    %350 = vector.broadcast %349 : vector<1x128xf32> to vector<20x128xf32>
    %351 = arith.addf %348, %350 : vector<20x128xf32>
    %c2_i32 = arith.constant 2 : i32
    %352 = vector.broadcast %c2_i32 : i32 to vector<1x128xi32>
    %353 = arith.cmpi slt, %49, %352 : vector<1x128xi32>
    %cst_205 = arith.constant -1.000000e+30 : f32
    %354 = vector.shape_cast %353 : vector<1x128xi1> to vector<1x128xi1>
    %355 = vector.broadcast %354 : vector<1x128xi1> to vector<20x128xi1>
    %356 = vector.broadcast %cst_205 : f32 to vector<20x128xf32>
    %357 = arith.select %355, %351, %356 : vector<20x128xi1>, vector<20x128xf32>
    %cst_206 = arith.constant dense<0xFF800000> : vector<20xf32>
    %358 = vector.multi_reduction <maximumf>, %357, %cst_206 [1] : vector<20x128xf32> to vector<20xf32>
    %359 = vector.shape_cast %358 : vector<20xf32> to vector<20x1xf32>
    %360 = vector.broadcast %359 : vector<20x1xf32> to vector<20x128xf32>
    %361 = arith.subf %357, %360 : vector<20x128xf32>
    %362 = math.exp %361 : vector<20x128xf32>
    %cst_207 = arith.constant dense<0.000000e+00> : vector<20xf32>
    %363 = vector.multi_reduction <add>, %362, %cst_207 [1] : vector<20x128xf32> to vector<20xf32>
    %364 = vector.shape_cast %363 : vector<20xf32> to vector<20x1xf32>
    %365 = vector.broadcast %364 : vector<20x1xf32> to vector<20x128xf32>
    %366 = arith.divf %362, %365 : vector<20x128xf32>
    %c0_208 = arith.constant 0 : index
    %c0_209 = arith.constant 0 : index
    %367 = vector.load %arg15[%c0_208, %c0_209] : memref<20x128xf32, #tpu.memory_space<vmem>>, vector<20x128xf32>
    tpu.vector_store %arg15[%c0_208, %c0_209], %366 {strides = array<i32>} : memref<20x128xf32, #tpu.memory_space<vmem>>, vector<20x128xf32>,
    %368 = vector.broadcast %359 : vector<20x1xf32> to vector<20x128xf32>
    %369 = arith.subf %357, %368 : vector<20x128xf32>
    %370 = math.log %364 : vector<20x1xf32>
    %371 = vector.broadcast %370 : vector<20x1xf32> to vector<20x128xf32>
    %372 = arith.subf %369, %371 : vector<20x128xf32>
    %c0_210 = arith.constant 0 : index
    %c0_211 = arith.constant 0 : index
    %373 = vector.load %arg20[%c0_210, %c0_211] : memref<20x128xf32, #tpu.memory_space<vmem>>, vector<20x128xf32>
    %c0_212 = arith.constant 0 : index
    %c0_213 = arith.constant 0 : index
    %374 = vector.load %arg14[%c0_212, %c0_213] : memref<1x128xf32, #tpu.memory_space<vmem>>, vector<1x128xf32>
    %375 = vector.broadcast %374 : vector<1x128xf32> to vector<20x128xf32>
    %376 = arith.mulf %375, %373 : vector<20x128xf32>
    %cst_214 = arith.constant dense<0.000000e+00> : vector<20xf32>
    %377 = vector.multi_reduction <add>, %376, %cst_214 [1] : vector<20x128xf32> to vector<20xf32>
    %378 = vector.shape_cast %377 : vector<20xf32> to vector<20x1xf32>
    %379 = arith.mulf %372, %373 : vector<20x128xf32>
    %cst_215 = arith.constant dense<0.000000e+00> : vector<20xf32>
    %380 = vector.multi_reduction <add>, %379, %cst_215 [1] : vector<20x128xf32> to vector<20xf32>
    %381 = vector.shape_cast %380 : vector<20xf32> to vector<20x1xf32>
    %cst_216 = arith.constant 0.000000e+00 : f32
    %382 = vector.broadcast %cst_216 : f32 to vector<20x1xf32>
    %383 = arith.subf %382, %381 : vector<20x1xf32>
    %384 = arith.mulf %378, %383 : vector<20x1xf32>
    %cst_217 = arith.constant dense<0.000000e+00> : vector<1xf32>
    %385 = vector.multi_reduction <add>, %384, %cst_217 [0] : vector<20x1xf32> to vector<1xf32>
    %386 = vector.shape_cast %385 : vector<1xf32> to vector<1x1xf32>
    %cst_218 = arith.constant dense<0.000000e+00> : vector<1xf32>
    %387 = vector.multi_reduction <add>, %378, %cst_218 [0] : vector<20x1xf32> to vector<1xf32>
    %388 = vector.shape_cast %387 : vector<1xf32> to vector<1x1xf32>
    %389 = arith.divf %386, %388 : vector<1x1xf32>
    %c0_219 = arith.constant 0 : index
    %c0_220 = arith.constant 0 : index
    %390 = vector.load %arg16[%c0_219, %c0_220] : memref<1x1xf32, #tpu.memory_space<vmem>>, vector<1x1xf32>
    tpu.vector_store %arg16[%c0_219, %c0_220], %389 {strides = array<i32>} : memref<1x1xf32, #tpu.memory_space<vmem>>, vector<1x1xf32>,
    return
  }
}

</mosaic_0001>

<llo_original>
// kernel: gcn_edge_forward.1
$region0: #{gcn_edge_forward.1}
  #allocation0 [shape = 'u32[]', space=smem, size = 0x4, offset = 0x4, fixed_abs, tag = 'smem constant byte address 0x4 - core index']
  #allocation1 [shape = 'u32[144,128]{1,0:T(1,128)}', space=vmem, size = 0x12000, scoped, tag = 'internal scratch']
  #allocation2 [shape = 'f32[10,128]{1,0:T(8,128)}', space=vmem, size = 0x2000, scoped, tag = 'scratch operand']
  #allocation3 [shape = 'f32[10,128]{1,0:T(8,128)}', space=vmem, size = 0x2000, scoped, tag = 'scratch operand']
  #allocation4 [shape = 'f32[20,128]{1,0:T(8,128)}', space=vmem, size = 0x3000, scoped, tag = 'scratch operand']
  #allocation5 [shape = 'f32[20,128]{1,0:T(8,128)}', space=vmem, size = 0x3000, scoped, tag = 'scratch operand']
  %s0 = inlined_call_operand.vmem [shape: s32[20], index: 0, kind: input, shape index: {}]
  %s1 = inlined_call_operand.vmem [shape: s32[20], index: 1, kind: input, shape index: {}]
  %s2 = inlined_call_operand.vmem [shape: s32[20], index: 2, kind: input, shape index: {}]
  %s3 = inlined_call_operand.vmem [shape: f32[10,10], index: 3, kind: input, shape index: {}]
  %s4 = inlined_call_operand.vmem [shape: f32[10,32], index: 4, kind: input, shape index: {}]
  %s5 = inlined_call_operand.vmem [shape: f32[32,128], index: 5, kind: input, shape index: {}]
  %s6 = inlined_call_operand.vmem [shape: f32[1,128], index: 6, kind: input, shape index: {}]
  %s7 = inlined_call_operand.vmem [shape: f32[1,128], index: 7, kind: input, shape index: {}]
  %s8 = inlined_call_operand.vmem [shape: f32[1,128], index: 8, kind: input, shape index: {}]
  %s9 = inlined_call_operand.vmem [shape: f32[128,128], index: 9, kind: input, shape index: {}]
  %s10 = inlined_call_operand.vmem [shape: f32[128,128], index: 10, kind: input, shape index: {}]
  %s11 = inlined_call_operand.vmem [shape: f32[1,128], index: 11, kind: input, shape index: {}]
  %s12 = inlined_call_operand.vmem [shape: f32[128,128], index: 12, kind: input, shape index: {}]
  %s13 = inlined_call_operand.vmem [shape: f32[1,128], index: 13, kind: input, shape index: {}]
  %s14 = inlined_call_operand.vmem [shape: f32[1,128], index: 14, kind: input, shape index: {}]
  %s15 = inlined_call_operand.vmem [shape: f32[20,128], index: 15, kind: output, shape index: {0}]
  %s16 = inlined_call_operand.hbm [shape: f32[1,1], index: 16, kind: output, shape index: {1}]
  %17 = xla_tuple %s15, %s16
  %s18 = sld [smem:[#allocation0]]
  $region90: #{gcn_edge_forward.1} parent=0
    _
  %s20 = ssub.s32 1, %s18
  %s21 = scalar_select 0, %s20, %s18
  $region1: #{gcn_edge_forward.1} parent=0
    #allocation6 [shape = 'u8[512]{0}', space=smem, size = 0x200, scoped, tag = 'input window, operand 0, single buffered']
    #allocation7 [shape = 's32[1]{0}', space=sflag, size = 0x4, scoped, tag = 'scoped memory for gcn_edge_forward.1']
    #allocation8 [shape = 's32[1]{0}', space=sflag, size = 0x4, scoped, tag = 'scoped memory for gcn_edge_forward.1']
    #allocation9 [shape = 'u8[512]{0}', space=smem, size = 0x200, scoped, tag = 'input window, operand 1, single buffered']
    #allocation10 [shape = 's32[1]{0}', space=sflag, size = 0x4, scoped, tag = 'scoped memory for gcn_edge_forward.1']
    #allocation11 [shape = 'u8[512]{0}', space=smem, size = 0x200, scoped, tag = 'input window, operand 2, single buffered']
    #allocation12 [shape = 'u8[512]{0}', space=vmem, size = 0x400, scoped, tag = 'output window, operand 1, single buffered']
    %22 = vsyncpa [#allocation8], 0
    %23 = vsyncpa [#allocation10], 0
    %24 = vsyncpa [#allocation7], 0
    // Predicated region
    $region2: #{gcn_edge_forward.1} parent=1 // pred_check
      _
    $region3: #{gcn_edge_forward.1} parent=1 // pred_check_branch
      %26 = sbr.rel (0) target = $region5
    $region4: #{gcn_edge_forward.1} parent=1 // pred_region
      %s28 = ssub.s32 16, 16
      %29 = vsyncadd [#allocation8], %s28
      %s31 = sshll.u32 %s0, 4
      %s32 = int_to_ptr.vmem [resolvable:$true] %s31
      %34 = dma.vmem_to_smem %s32, 16, [#allocation6], [#allocation8]
    $region5: #{gcn_edge_forward.1} parent=1 // pred_fallthru
      _
    // Predicated region
    $region6: #{gcn_edge_forward.1} parent=1 // pred_check
      _
    $region7: #{gcn_edge_forward.1} parent=1 // pred_check_branch
      %36 = sbr.rel (0) target = $region9
    $region8: #{gcn_edge_forward.1} parent=1 // pred_region
      %s38 = ssub.s32 16, 16
      %39 = vsyncadd [#allocation10], %s38
      %s41 = sshll.u32 %s1, 4
      %s42 = int_to_ptr.vmem [resolvable:$true] %s41
      %44 = dma.vmem_to_smem %s42, 16, [#allocation9], [#allocation10]
    $region9: #{gcn_edge_forward.1} parent=1 // pred_fallthru
      _
    // Predicated region
    $region10: #{gcn_edge_forward.1} parent=1 // pred_check
      _
    $region11: #{gcn_edge_forward.1} parent=1 // pred_check_branch
      %46 = sbr.rel (0) target = $region13
    $region12: #{gcn_edge_forward.1} parent=1 // pred_region
      %s48 = ssub.s32 16, 16
      %49 = vsyncadd [#allocation10], %s48
      %s51 = sshll.u32 %s2, 4
      %s52 = int_to_ptr.vmem [resolvable:$true] %s51
      %54 = dma.vmem_to_smem %s52, 16, [#allocation11], [#allocation10]
    $region13: #{gcn_edge_forward.1} parent=1 // pred_fallthru
      _
    // Predicated region
    $region14: #{gcn_edge_forward.1} parent=1 // pred_check
      _
    $region15: #{gcn_edge_forward.1} parent=1 // pred_check_branch
      %56 = sbr.rel (0) target = $region17
    $region16: #{gcn_edge_forward.1} parent=1 // pred_region
      _
    $region17: #{gcn_edge_forward.1} parent=1 // pred_fallthru
      _
    // Predicated region
    $region18: #{gcn_edge_forward.1} parent=1 // pred_check
      _
    $region19: #{gcn_edge_forward.1} parent=1 // pred_check_branch
      %58 = sbr.rel (0) target = $region21
    $region20: #{gcn_edge_forward.1} parent=1 // pred_region
      _
    $region21: #{gcn_edge_forward.1} parent=1 // pred_fallthru
      _
    // Predicated region
    $region22: #{gcn_edge_forward.1} parent=1 // pred_check
      _
    $region23: #{gcn_edge_forward.1} parent=1 // pred_check_branch
      %60 = sbr.rel (0) target = $region25
    $region24: #{gcn_edge_forward.1} parent=1 // pred_region
      _
    $region25: #{gcn_edge_forward.1} parent=1 // pred_fallthru
      _
    // Predicated region
    $region26: #{gcn_edge_forward.1} parent=1 // pred_check
      _
    $region27: #{gcn_edge_forward.1} parent=1 // pred_check_branch
      %62 = sbr.rel (0) target = $region29
    $region28: #{gcn_edge_forward.1} parent=1 // pred_region
      _
    $region29: #{gcn_edge_forward.1} parent=1 // pred_fallthru
      _
    // Predicated region
    $region30: #{gcn_edge_forward.1} parent=1 // pred_check
      _
    $region31: #{gcn_edge_forward.1} parent=1 // pred_check_branch
      %64 = sbr.rel (0) target = $region33
    $region32: #{gcn_edge_forward.1} parent=1 // pred_region
      _
    $region33: #{gcn_edge_forward.1} parent=1 // pred_fallthru
      _
    // Predicated region
    $region34: #{gcn_edge_forward.1} parent=1 // pred_check
      _
    $region35: #{gcn_edge_forward.1} parent=1 // pred_check_branch
      %66 = sbr.rel (0) target = $region37
    $region36: #{gcn_edge_forward.1} parent=1 // pred_region
      _
    $region37: #{gcn_edge_forward.1} parent=1 // pred_fallthru
      _
    // Predicated region
    $region38: #{gcn_edge_forward.1} parent=1 // pred_check
      _
    $region39: #{gcn_edge_forward.1} parent=1 // pred_check_branch
      %68 = sbr.rel (0) target = $region41
    $region40: #{gcn_edge_forward.1} parent=1 // pred_region
      _
    $region41: #{gcn_edge_forward.1} parent=1 // pred_fallthru
      _
    // Predicated region
    $region42: #{gcn_edge_forward.1} parent=1 // pred_check
      _
    $region43: #{gcn_edge_forward.1} parent=1 // pred_check_branch
      %70 = sbr.rel (0) target = $region45
    $region44: #{gcn_edge_forward.1} parent=1 // pred_region
      _
    $region45: #{gcn_edge_forward.1} parent=1 // pred_fallthru
      _
    // Predicated region
    $region46: #{gcn_edge_forward.1} parent=1 // pred_check
      _
    $region47: #{gcn_edge_forward.1} parent=1 // pred_check_branch
      %72 = sbr.rel (0) target = $region49
    $region48: #{gcn_edge_forward.1} parent=1 // pred_region
      _
    $region49: #{gcn_edge_forward.1} parent=1 // pred_fallthru
      _
    // Predicated region
    $region50: #{gcn_edge_forward.1} parent=1 // pred_check
      _
    $region51: #{gcn_edge_forward.1} parent=1 // pred_check_branch
      %74 = sbr.rel (0) target = $region53
    $region52: #{gcn_edge_forward.1} parent=1 // pred_region
      _
    $region53: #{gcn_edge_forward.1} parent=1 // pred_fallthru
      _
    // Predicated region
    $region54: #{gcn_edge_forward.1} parent=1 // pred_check
      _
    $region55: #{gcn_edge_forward.1} parent=1 // pred_check_branch
      %76 = sbr.rel (0) target = $region57
    $region56: #{gcn_edge_forward.1} parent=1 // pred_region
      _
    $region57: #{gcn_edge_forward.1} parent=1 // pred_fallthru
      _
    // Predicated region
    $region58: #{gcn_edge_forward.1} parent=1 // pred_check
      _
    $region59: #{gcn_edge_forward.1} parent=1 // pred_check_branch
      %78 = sbr.rel (0) target = $region61
    $region60: #{gcn_edge_forward.1} parent=1 // pred_region
      _
    $region61: #{gcn_edge_forward.1} parent=1 // pred_fallthru
      _
    // Predicated region
    $region62: #{gcn_edge_forward.1} parent=1 // pred_check
      _
    $region63: #{gcn_edge_forward.1} parent=1 // pred_check_branch
      %80 = sbr.rel (0) target = $region65
    $region64: #{gcn_edge_forward.1} parent=1 // pred_region
      %81 = dma.done [#allocation8], 16
    $region65: #{gcn_edge_forward.1} parent=1 // pred_fallthru
      _
    // Predicated region
    $region66: #{gcn_edge_forward.1} parent=1 // pred_check
      _
    $region67: #{gcn_edge_forward.1} parent=1 // pred_check_branch
      %83 = sbr.rel (0) target = $region69
    $region68: #{gcn_edge_forward.1} parent=1 // pred_region
      %84 = dma.done [#allocation10], 16
    $region69: #{gcn_edge_forward.1} parent=1 // pred_fallthru
      _
    // Predicated region
    $region70: #{gcn_edge_forward.1} parent=1 // pred_check
      _
    $region71: #{gcn_edge_forward.1} parent=1 // pred_check_branch
      %86 = sbr.rel (0) target = $region73
    $region72: #{gcn_edge_forward.1} parent=1 // pred_region
      %87 = dma.done [#allocation10], 16
    $region73: #{gcn_edge_forward.1} parent=1 // pred_fallthru
      _
    %88 = sfence
    %v89 = vld [vmem:[%s4] sm:$0xff]
    %v90 = vld [vmem:[%s4 + $0x8] sm:$0x3]
    %v91 = vld [vmem:[%s5] sm:$0xff]
    %v92 = vld [vmem:[%s5 + $0x8] sm:$0xff]
    %v93 = vld [vmem:[%s5 + $0x10] sm:$0xff]
    %v94 = vld [vmem:[%s5 + $0x18] sm:$0xff]
    %vm95 = vcmask 261120
    %v97 = vsel %vm95, %v89, 0
    %v100 = vsel %vm95, %v90, 0
    %102 = vmatprep.subr.mxu0 0.0
    %103 = vmatpush1.msra.mxu0 %v91
    %104 = vmatprep.subr.mxu0 0.0
    %105 = vmatpush1.msra.mxu0 %v92
    %106 = vmatprep.subr.mxu0 0.0
    %107 = vmatpush1.msra.mxu0 %v93
    %108 = vmatprep.subr.mxu0 0.0
    %109 = vmatpush1.msra.mxu0 %v94
    %110 = vmatprep.subr.mxu0 0.0
    %111 = vmatpush1.msra.mxu0 0.0
    %112 = vmatprep.subr.mxu0 0.0
    %113 = vmatpush1.msra.mxu0 0.0
    %114 = vmatprep.subr.mxu0 0.0
    %115 = vmatpush1.msra.mxu0 0.0
    %116 = vmatprep.subr.mxu0 0.0
    %117 = vmatpush1.msra.mxu0 0.0
    %118 = vmatprep.subr.mxu0 0.0
    %119 = vmatpush1.msra.mxu0 0.0
    %120 = vmatprep.subr.mxu0 0.0
    %121 = vmatpush1.msra.mxu0 0.0
    %122 = vmatprep.subr.mxu0 0.0
    %123 = vmatpush1.msra.mxu0 0.0
    %124 = vmatprep.subr.mxu0 0.0
    %125 = vmatpush1.msra.mxu0 0.0
    %126 = vmatprep.subr.mxu0 0.0
    %127 = vmatpush1.msra.mxu0 0.0
    %128 = vmatprep.subr.mxu0 0.0
    %129 = vmatpush1.msra.mxu0 0.0
    %130 = vmatprep.subr.mxu0 0.0
    %131 = vmatpush1.msra.mxu0 0.0
    %132 = vmatprep.subr.mxu0 0.0
    %133 = vmatpush1.msra.mxu0 0.0
    %134 = vmatprep.subr.mxu0 0.0
    %135 = vmatpush1.msra.mxu0 0.0
    %136 = vmatprep.subr.mxu0 0.0
    %137 = vmatpush1.msra.mxu0 0.0
    %138 = vmatprep.subr.mxu0 0.0
    %139 = vmatpush1.msra.mxu0 0.0
    %140 = vmatprep.subr.mxu0 0.0
    %141 = vmatpush1.msra.mxu0 0.0
    %142 = vmatprep.subr.mxu0 0.0
    %143 = vmatpush1.msra.mxu0 0.0
    %144 = vmatprep.subr.mxu0 0.0
    %145 = vmatpush1.msra.mxu0 0.0
    %146 = vmatprep.subr.mxu0 0.0
    %147 = vmatpush1.msra.mxu0 0.0
    %148 = vmatprep.subr.mxu0 0.0
    %149 = vmatpush1.msra.mxu0 0.0
    %150 = vmatprep.subr.mxu0 0.0
    %151 = vmatpush1.msra.mxu0 0.0
    %152 = vmatprep.subr.mxu0 0.0
    %153 = vmatpush1.msra.mxu0 0.0
    %154 = vmatprep.subr.mxu0 0.0
    %155 = vmatpush1.msra.mxu0 0.0
    %156 = vmatprep.subr.mxu0 0.0
    %157 = vmatpush1.msra.mxu0 0.0
    %158 = vmatprep.subr.mxu0 0.0
    %159 = vmatpush1.msra.mxu0 0.0
    %160 = vmatprep.subr.mxu0 0.0
    %161 = vmatpush1.msra.mxu0 0.0
    %162 = vmatprep.subr.mxu0 0.0
    %163 = vmatpush1.msra.mxu0 0.0
    %164 = vmatprep.subr.mxu0 0.0
    %165 = vmatpush1.msra.mxu0 0.0
    %166 = vmatprep.mubr.f32.mxu0 0.0
    %167 = vmatmul.mubr.f32.gmra.mrb[0].mxu0 %v97
    %v168 = vpop.f32.mrb[0].mxu0
    %v169 = vadd.f32 0.0, %v168
    %v170 = vpop.f32.mrb[0].mxu0
    %171 = vmatprep.mubr.f32.mxu0 0.0
    %172 = vmatmul.mubr.f32.gmra.mrb[0].mxu0 %v100
    %v173 = vpop.f32.mrb[0].mxu0
    %v174 = vadd.f32 0.0, %v173
    %v175 = vpop.f32.mrb[0].mxu0
    %176 = vdwg.mxu0
    %v177 = vld [vmem:[%s3] sm:$0xff]
    %v178 = vld [vmem:[%s3 + $0x8] sm:$0x3]
    %v179 = vld [vmem:[%s6] sm:$0x1]
    %v181 = vlaneseq
    %v182 = vshrl.u32 %v181, 7
    %v183 = vsub.s32 0, %v182
    %v184 = vrot.slane %v179, %v183
    %vm186 = vcmask 80896
    %v188 = vsel %vm186, %v177, 0
    %v191 = vsel %vm186, %v178, 0
    %vm193 = vcmask 1041408
    %v195 = vsel %vm193, %v174, 0
    %197 = vmatprep.subr.mxu0 0.0
    %198 = vmatpush1.msra.mxu0 %v169
    %199 = vmatprep.subr.mxu0 0.0
    %200 = vmatpush1.msra.mxu0 %v195
    %201 = vmatprep.subr.mxu0 0.0
    %202 = vmatpush1.msra.mxu0 0.0
    %203 = vmatprep.subr.mxu0 0.0
    %204 = vmatpush1.msra.mxu0 0.0
    %205 = vmatprep.subr.mxu0 0.0
    %206 = vmatpush1.msra.mxu0 0.0
    %207 = vmatprep.subr.mxu0 0.0
    %208 = vmatpush1.msra.mxu0 0.0
    %209 = vmatprep.subr.mxu0 0.0
    %210 = vmatpush1.msra.mxu0 0.0
    %211 = vmatprep.subr.mxu0 0.0
    %212 = vmatpush1.msra.mxu0 0.0
    %213 = vmatprep.subr.mxu0 0.0
    %214 = vmatpush1.msra.mxu0 0.0
    %215 = vmatprep.subr.mxu0 0.0
    %216 = vmatpush1.msra.mxu0 0.0
    %217 = vmatprep.subr.mxu0 0.0
    %218 = vmatpush1.msra.mxu0 0.0
    %219 = vmatprep.subr.mxu0 0.0
    %220 = vmatpush1.msra.mxu0 0.0
    %221 = vmatprep.subr.mxu0 0.0
    %222 = vmatpush1.msra.mxu0 0.0
    %223 = vmatprep.subr.mxu0 0.0
    %224 = vmatpush1.msra.mxu0 0.0
    %225 = vmatprep.subr.mxu0 0.0
    %226 = vmatpush1.msra.mxu0 0.0
    %227 = vmatprep.subr.mxu0 0.0
    %228 = vmatpush1.msra.mxu0 0.0
    %229 = vmatprep.subr.mxu0 0.0
    %230 = vmatpush1.msra.mxu0 0.0
    %231 = vmatprep.subr.mxu0 0.0
    %232 = vmatpush1.msra.mxu0 0.0
    %233 = vmatprep.subr.mxu0 0.0
    %234 = vmatpush1.msra.mxu0 0.0
    %235 = vmatprep.subr.mxu0 0.0
    %236 = vmatpush1.msra.mxu0 0.0
    %237 = vmatprep.subr.mxu0 0.0
    %238 = vmatpush1.msra.mxu0 0.0
    %239 = vmatprep.subr.mxu0 0.0
    %240 = vmatpush1.msra.mxu0 0.0
    %241 = vmatprep.subr.mxu0 0.0
    %242 = vmatpush1.msra.mxu0 0.0
    %243 = vmatprep.subr.mxu0 0.0
    %244 = vmatpush1.msra.mxu0 0.0
    %245 = vmatprep.subr.mxu0 0.0
    %246 = vmatpush1.msra.mxu0 0.0
    %247 = vmatprep.subr.mxu0 0.0
    %248 = vmatpush1.msra.mxu0 0.0
    %249 = vmatprep.subr.mxu0 0.0
    %250 = vmatpush1.msra.mxu0 0.0
    %251 = vmatprep.subr.mxu0 0.0
    %252 = vmatpush1.msra.mxu0 0.0
    %253 = vmatprep.subr.mxu0 0.0
    %254 = vmatpush1.msra.mxu0 0.0
    %255 = vmatprep.subr.mxu0 0.0
    %256 = vmatpush1.msra.mxu0 0.0
    %257 = vmatprep.subr.mxu0 0.0
    %258 = vmatpush1.msra.mxu0 0.0
    %259 = vmatprep.subr.mxu0 0.0
    %260 = vmatpush1.msra.mxu0 0.0
    %261 = vmatprep.mubr.f32.mxu0 0.0
    %262 = vmatmul.mubr.f32.gmra.mrb[0].mxu0 %v188
    %v263 = vpop.f32.mrb[0].mxu0
    %v264 = vadd.f32 %v184, %v263
    %v265 = vpop.f32.mrb[0].mxu0
    %266 = vmatprep.mubr.f32.mxu0 0.0
    %267 = vmatmul.mubr.f32.gmra.mrb[0].mxu0 %v191
    %v268 = vpop.f32.mrb[0].mxu0
    %v269 = vadd.f32 %v184, %v268
    %v270 = vpop.f32.mrb[0].mxu0
    %271 = vdwg.mxu0
    %v272 = vmul.f32 %v264, 0.5
    %v273 = vmul.f32 %v269, 0.5
    %v274 = vmul.f32 %v264, 0.044715
    %v275 = vmul.f32 %v269, 0.044715
    %v276 = vmul.f32 %v274, %v264
    %v277 = vmul.f32 %v275, %v269
    %v278 = vmul.f32 %v276, %v264
    %v279 = vmul.f32 %v277, %v269
    %v280 = vadd.f32 %v264, %v278
    %v281 = vadd.f32 %v269, %v279
    %v282 = vmul.f32 %v280, 0.7978846
    %v283 = vmul.f32 %v281, 0.7978846
    %v284 = vtanh.pop %v282
    %v285 = vtanh.pop %v283
    %v286 = vadd.f32 %v284, 1.0
    %v287 = vadd.f32 %v285, 1.0
    %v288 = vmul.f32 %v272, %v286
    %v289 = vmul.f32 %v273, %v287
    %v290 = vsel %vm193, %v289, 0.0
    %v291 = vadd.f32 %v288, %v290
    %v292 = vrot.slane %v291, 4
    %v293 = vadd.f32 %v291, %v292
    %v294 = vrot.slane %v293, 2
    %v295 = vadd.f32 %v293, %v294
    %v296 = vrot.slane %v295, 1
    %v297 = vadd.f32 %v295, %v296
    %v298 = vmul.f32 %v297, 0.1
    %v299 = vsub.f32 %v288, %v298
    %v300 = vsub.f32 %v289, %v298
    %v301 = vmul.f32 %v299, %v299
    %v302 = vmul.f32 %v300, %v300
    %v303 = vsel %vm193, %v302, 0.0
    %v304 = vadd.f32 %v301, %v303
    %v305 = vrot.slane %v304, 4
    %v306 = vadd.f32 %v304, %v305
    %v307 = vrot.slane %v306, 2
    %v308 = vadd.f32 %v306, %v307
    %v309 = vrot.slane %v308, 1
    %v310 = vadd.f32 %v308, %v309
    %v311 = vmul.f32 %v310, 0.1
    %v312 = vld [vmem:[%s7] sm:$0x1]
    %v313 = vadd.f32 %v311, 1e-05
    %v314 = vrsqrt.pop %v313
    %v315 = vmul.f32 %v299, %v314
    %v316 = vmul.f32 %v300, %v314
    %v318 = vlaneseq
    %v319 = vshrl.u32 %v318, 7
    %v320 = vsub.s32 0, %v319
    %v321 = vrot.slane %v312, %v320
    %v323 = vmul.f32 %v321, %v315
    %v324 = vmul.f32 %v321, %v316
    %v325 = vld [vmem:[%s8] sm:$0x1]
    %v327 = vlaneseq
    %v328 = vshrl.u32 %v327, 7
    %v329 = vsub.s32 0, %v328
    %v330 = vrot.slane %v325, %v329
    %v332 = vadd.f32 %v323, %v330
    %v333 = vadd.f32 %v324, %v330
    %v334 = vld [vmem:[%s9] sm:$0xff]
    %v335 = vld [vmem:[%s9 + $0x8] sm:$0xff]
    %v336 = vld [vmem:[%s9 + $0x10] sm:$0xff]
    %v337 = vld [vmem:[%s9 + $0x18] sm:$0xff]
    %v338 = vld [vmem:[%s9 + $0x20] sm:$0xff]
    %v339 = vld [vmem:[%s9 + $0x28] sm:$0xff]
    %v340 = vld [vmem:[%s9 + $0x30] sm:$0xff]
    %v341 = vld [vmem:[%s9 + $0x38] sm:$0xff]
    %v342 = vld [vmem:[%s9 + $0x40] sm:$0xff]
    %v343 = vld [vmem:[%s9 + $0x48] sm:$0xff]
    %v344 = vld [vmem:[%s9 + $0x50] sm:$0xff]
    %v345 = vld [vmem:[%s9 + $0x58] sm:$0xff]
    %v346 = vld [vmem:[%s9 + $0x60] sm:$0xff]
    %v347 = vld [vmem:[%s9 + $0x68] sm:$0xff]
    %v348 = vld [vmem:[%s9 + $0x70] sm:$0xff]
    %v349 = vld [vmem:[%s9 + $0x78] sm:$0xff]
    %350 = vmatprep.subr.mxu0 0.0
    %351 = vmatpush1.msra.mxu0 %v334
    %352 = vmatprep.subr.mxu0 0.0
    %353 = vmatpush1.msra.mxu0 %v335
    %354 = vmatprep.subr.mxu0 0.0
    %355 = vmatpush1.msra.mxu0 %v336
    %356 = vmatprep.subr.mxu0 0.0
    %357 = vmatpush1.msra.mxu0 %v337
    %358 = vmatprep.subr.mxu0 0.0
    %359 = vmatpush1.msra.mxu0 %v338
    %360 = vmatprep.subr.mxu0 0.0
    %361 = vmatpush1.msra.mxu0 %v339
    %362 = vmatprep.subr.mxu0 0.0
    %363 = vmatpush1.msra.mxu0 %v340
    %364 = vmatprep.subr.mxu0 0.0
    %365 = vmatpush1.msra.mxu0 %v341
    %366 = vmatprep.subr.mxu0 0.0
    %367 = vmatpush1.msra.mxu0 %v342
    %368 = vmatprep.subr.mxu0 0.0
    %369 = vmatpush1.msra.mxu0 %v343
    %370 = vmatprep.subr.mxu0 0.0
    %371 = vmatpush1.msra.mxu0 %v344
    %372 = vmatprep.subr.mxu0 0.0
    %373 = vmatpush1.msra.mxu0 %v345
    %374 = vmatprep.subr.mxu0 0.0
    %375 = vmatpush1.msra.mxu0 %v346
    %376 = vmatprep.subr.mxu0 0.0
    %377 = vmatpush1.msra.mxu0 %v347
    %378 = vmatprep.subr.mxu0 0.0
    %379 = vmatpush1.msra.mxu0 %v348
    %380 = vmatprep.subr.mxu0 0.0
    %381 = vmatpush1.msra.mxu0 %v349
    %382 = vmatprep.subr.mxu0 0.0
    %383 = vmatpush1.msra.mxu0 0.0
    %384 = vmatprep.subr.mxu0 0.0
    %385 = vmatpush1.msra.mxu0 0.0
    %386 = vmatprep.subr.mxu0 0.0
    %387 = vmatpush1.msra.mxu0 0.0
    %388 = vmatprep.subr.mxu0 0.0
    %389 = vmatpush1.msra.mxu0 0.0
    %390 = vmatprep.subr.mxu0 0.0
    %391 = vmatpush1.msra.mxu0 0.0
    %392 = vmatprep.subr.mxu0 0.0
    %393 = vmatpush1.msra.mxu0 0.0
    %394 = vmatprep.subr.mxu0 0.0
    %395 = vmatpush1.msra.mxu0 0.0
    %396 = vmatprep.subr.mxu0 0.0
    %397 = vmatpush1.msra.mxu0 0.0
    %398 = vmatprep.subr.mxu0 0.0
    %399 = vmatpush1.msra.mxu0 0.0
    %400 = vmatprep.subr.mxu0 0.0
    %401 = vmatpush1.msra.mxu0 0.0
    %402 = vmatprep.subr.mxu0 0.0
    %403 = vmatpush1.msra.mxu0 0.0
    %404 = vmatprep.subr.mxu0 0.0
    %405 = vmatpush1.msra.mxu0 0.0
    %406 = vmatprep.subr.mxu0 0.0
    %407 = vmatpush1.msra.mxu0 0.0
    %408 = vmatprep.subr.mxu0 0.0
    %409 = vmatpush1.msra.mxu0 0.0
    %410 = vmatprep.subr.mxu0 0.0
    %411 = vmatpush1.msra.mxu0 0.0
    %412 = vmatprep.subr.mxu0 0.0
    %413 = vmatpush1.msra.mxu0 0.0
    %414 = vmatprep.mubr.f32.mxu0 0.0
    %415 = vmatmul.mubr.f32.gmra.mrb[0].mxu0 %v332
    %v416 = vpop.f32.mrb[0].mxu0
    %v417 = vadd.f32 0.0, %v416
    %v418 = vpop.f32.mrb[0].mxu0
    %419 = vmatprep.mubr.f32.mxu0 0.0
    %420 = vmatmul.mubr.f32.gmra.mrb[0].mxu0 %v333
    %v421 = vpop.f32.mrb[0].mxu0
    %v422 = vadd.f32 0.0, %v421
    %v423 = vpop.f32.mrb[0].mxu0
    %424 = vdwg.mxu0
    %425 = vst [vmem:[#allocation2] sm:$0xff] %v417
    %426 = vst [vmem:[#allocation2 + $0x8] sm:$0x3] %v422
    %v427 = vld [vmem:[%s10] sm:$0xff]
    %v428 = vld [vmem:[%s10 + $0x8] sm:$0xff]
    %v429 = vld [vmem:[%s10 + $0x10] sm:$0xff]
    %v430 = vld [vmem:[%s10 + $0x18] sm:$0xff]
    %v431 = vld [vmem:[%s10 + $0x20] sm:$0xff]
    %v432 = vld [vmem:[%s10 + $0x28] sm:$0xff]
    %v433 = vld [vmem:[%s10 + $0x30] sm:$0xff]
    %v434 = vld [vmem:[%s10 + $0x38] sm:$0xff]
    %v435 = vld [vmem:[%s10 + $0x40] sm:$0xff]
    %v436 = vld [vmem:[%s10 + $0x48] sm:$0xff]
    %v437 = vld [vmem:[%s10 + $0x50] sm:$0xff]
    %v438 = vld [vmem:[%s10 + $0x58] sm:$0xff]
    %v439 = vld [vmem:[%s10 + $0x60] sm:$0xff]
    %v440 = vld [vmem:[%s10 + $0x68] sm:$0xff]
    %v441 = vld [vmem:[%s10 + $0x70] sm:$0xff]
    %v442 = vld [vmem:[%s10 + $0x78] sm:$0xff]
    %443 = vmatprep.subr.mxu0 0.0
    %444 = vmatpush1.msra.mxu0 %v427
    %445 = vmatprep.subr.mxu0 0.0
    %446 = vmatpush1.msra.mxu0 %v428
    %447 = vmatprep.subr.mxu0 0.0
    %448 = vmatpush1.msra.mxu0 %v429
    %449 = vmatprep.subr.mxu0 0.0
    %450 = vmatpush1.msra.mxu0 %v430
    %451 = vmatprep.subr.mxu0 0.0
    %452 = vmatpush1.msra.mxu0 %v431
    %453 = vmatprep.subr.mxu0 0.0
    %454 = vmatpush1.msra.mxu0 %v432
    %455 = vmatprep.subr.mxu0 0.0
    %456 = vmatpush1.msra.mxu0 %v433
    %457 = vmatprep.subr.mxu0 0.0
    %458 = vmatpush1.msra.mxu0 %v434
    %459 = vmatprep.subr.mxu0 0.0
    %460 = vmatpush1.msra.mxu0 %v435
    %461 = vmatprep.subr.mxu0 0.0
    %462 = vmatpush1.msra.mxu0 %v436
    %463 = vmatprep.subr.mxu0 0.0
    %464 = vmatpush1.msra.mxu0 %v437
    %465 = vmatprep.subr.mxu0 0.0
    %466 = vmatpush1.msra.mxu0 %v438
    %467 = vmatprep.subr.mxu0 0.0
    %468 = vmatpush1.msra.mxu0 %v439
    %469 = vmatprep.subr.mxu0 0.0
    %470 = vmatpush1.msra.mxu0 %v440
    %471 = vmatprep.subr.mxu0 0.0
    %472 = vmatpush1.msra.mxu0 %v441
    %473 = vmatprep.subr.mxu0 0.0
    %474 = vmatpush1.msra.mxu0 %v442
    %475 = vmatprep.subr.mxu0 0.0
    %476 = vmatpush1.msra.mxu0 0.0
    %477 = vmatprep.subr.mxu0 0.0
    %478 = vmatpush1.msra.mxu0 0.0
    %479 = vmatprep.subr.mxu0 0.0
    %480 = vmatpush1.msra.mxu0 0.0
    %481 = vmatprep.subr.mxu0 0.0
    %482 = vmatpush1.msra.mxu0 0.0
    %483 = vmatprep.subr.mxu0 0.0
    %484 = vmatpush1.msra.mxu0 0.0
    %485 = vmatprep.subr.mxu0 0.0
    %486 = vmatpush1.msra.mxu0 0.0
    %487 = vmatprep.subr.mxu0 0.0
    %488 = vmatpush1.msra.mxu0 0.0
    %489 = vmatprep.subr.mxu0 0.0
    %490 = vmatpush1.msra.mxu0 0.0
    %491 = vmatprep.subr.mxu0 0.0
    %492 = vmatpush1.msra.mxu0 0.0
    %493 = vmatprep.subr.mxu0 0.0
    %494 = vmatpush1.msra.mxu0 0.0
    %495 = vmatprep.subr.mxu0 0.0
    %496 = vmatpush1.msra.mxu0 0.0
    %497 = vmatprep.subr.mxu0 0.0
    %498 = vmatpush1.msra.mxu0 0.0
    %499 = vmatprep.subr.mxu0 0.0
    %500 = vmatpush1.msra.mxu0 0.0
    %501 = vmatprep.subr.mxu0 0.0
    %502 = vmatpush1.msra.mxu0 0.0
    %503 = vmatprep.subr.mxu0 0.0
    %504 = vmatpush1.msra.mxu0 0.0
    %505 = vmatprep.subr.mxu0 0.0
    %506 = vmatpush1.msra.mxu0 0.0
    %507 = vmatprep.mubr.f32.mxu0 0.0
    %508 = vmatmul.mubr.f32.gmra.mrb[0].mxu0 %v332
    %v509 = vpop.f32.mrb[0].mxu0
    %v510 = vadd.f32 0.0, %v509
    %v511 = vpop.f32.mrb[0].mxu0
    %512 = vmatprep.mubr.f32.mxu0 0.0
    %513 = vmatmul.mubr.f32.gmra.mrb[0].mxu0 %v333
    %v514 = vpop.f32.mrb[0].mxu0
    %v515 = vadd.f32 0.0, %v514
    %v516 = vpop.f32.mrb[0].mxu0
    %517 = vdwg.mxu0
    %518 = vst [vmem:[#allocation3] sm:$0xff] %v510
    %519 = vst [vmem:[#allocation3 + $0x8] sm:$0x3] %v515
    %v520 = vlaneseq
    %v521 = vand.u32 %v520, 127
    %s522 = sld [smem:[#allocation6]]
    %s523 = sld [smem:[#allocation9]]
    %s524 = sld [smem:[#allocation11]]
    %s525 = scalar_lea.vmem [#allocation2], %s522
    %v526 = vld [vmem:[%s525] sm:$0x1]
    %s527 = scalar_lea.vmem [#allocation3], %s523
    %v528 = vld [vmem:[%s527] sm:$0x1]
    %v529 = vadd.f32 %v526, %v528
    %530 = vst [vmem:[#allocation4] sm:$0x1] %v529
    %v531 = vstv %s524
    %vm532 = vcmp.eq.s32.totalorder %v521, %v531
    %v533 = vsel %vm532, 1, 0
    %v534 = vcvt.s32.f32 %v533
    %535 = vst [vmem:[#allocation5] sm:$0x1] %v534
    %s536 = sld [smem:[#allocation6 + $0x1]]
    %s537 = sld [smem:[#allocation9 + $0x1]]
    %s538 = sld [smem:[#allocation11 + $0x1]]
    %s539 = scalar_lea.vmem [#allocation2], %s536
    %v540 = vld [vmem:[%s539] sm:$0x1]
    %s541 = scalar_lea.vmem [#allocation3], %s537
    %v542 = vld [vmem:[%s541] sm:$0x1]
    %v543 = vadd.f32 %v540, %v542
    %544 = vst [vmem:[#allocation4 + $0x1] sm:$0x1] %v543
    %v545 = vstv %s538
    %vm546 = vcmp.eq.s32.totalorder %v521, %v545
    %v547 = vsel %vm546, 1, 0
    %v548 = vcvt.s32.f32 %v547
    %549 = vst [vmem:[#allocation5 + $0x1] sm:$0x1] %v548
    %s550 = sld [smem:[#allocation6 + $0x2]]
    %s551 = sld [smem:[#allocation9 + $0x2]]
    %s552 = sld [smem:[#allocation11 + $0x2]]
    %s553 = scalar_lea.vmem [#allocation2], %s550
    %v554 = vld [vmem:[%s553] sm:$0x1]
    %s555 = scalar_lea.vmem [#allocation3], %s551
    %v556 = vld [vmem:[%s555] sm:$0x1]
    %v557 = vadd.f32 %v554, %v556
    %558 = vst [vmem:[#allocation4 + $0x2] sm:$0x1] %v557
    %v559 = vstv %s552
    %vm560 = vcmp.eq.s32.totalorder %v521, %v559
    %v561 = vsel %vm560, 1, 0
    %v562 = vcvt.s32.f32 %v561
    %563 = vst [vmem:[#allocation5 + $0x2] sm:$0x1] %v562
    %s564 = sld [smem:[#allocation6 + $0x3]]
    %s565 = sld [smem:[#allocation9 + $0x3]]
    %s566 = sld [smem:[#allocation11 + $0x3]]
    %s567 = scalar_lea.vmem [#allocation2], %s564
    %v568 = vld [vmem:[%s567] sm:$0x1]
    %s569 = scalar_lea.vmem [#allocation3], %s565
    %v570 = vld [vmem:[%s569] sm:$0x1]
    %v571 = vadd.f32 %v568, %v570
    %572 = vst [vmem:[#allocation4 + $0x3] sm:$0x1] %v571
    %v573 = vstv %s566
    %vm574 = vcmp.eq.s32.totalorder %v521, %v573
    %v575 = vsel %vm574, 1, 0
    %v576 = vcvt.s32.f32 %v575
    %577 = vst [vmem:[#allocation5 + $0x3] sm:$0x1] %v576
    %s578 = sld [smem:[#allocation6 + $0x4]]
    %s579 = sld [smem:[#allocation9 + $0x4]]
    %s580 = sld [smem:[#allocation11 + $0x4]]
    %s581 = scalar_lea.vmem [#allocation2], %s578
    %v582 = vld [vmem:[%s581] sm:$0x1]
    %s583 = scalar_lea.vmem [#allocation3], %s579
    %v584 = vld [vmem:[%s583] sm:$0x1]
    %v585 = vadd.f32 %v582, %v584
    %586 = vst [vmem:[#allocation4 + $0x4] sm:$0x1] %v585
    %v587 = vstv %s580
    %vm588 = vcmp.eq.s32.totalorder %v521, %v587
    %v589 = vsel %vm588, 1, 0
    %v590 = vcvt.s32.f32 %v589
    %591 = vst [vmem:[#allocation5 + $0x4] sm:$0x1] %v590
    %s592 = sld [smem:[#allocation6 + $0x5]]
    %s593 = sld [smem:[#allocation9 + $0x5]]
    %s594 = sld [smem:[#allocation11 + $0x5]]
    %s595 = scalar_lea.vmem [#allocation2], %s592
    %v596 = vld [vmem:[%s595] sm:$0x1]
    %s597 = scalar_lea.vmem [#allocation3], %s593
    %v598 = vld [vmem:[%s597] sm:$0x1]
    %v599 = vadd.f32 %v596, %v598
    %600 = vst [vmem:[#allocation4 + $0x5] sm:$0x1] %v599
    %v601 = vstv %s594
    %vm602 = vcmp.eq.s32.totalorder %v521, %v601
    %v603 = vsel %vm602, 1, 0
    %v604 = vcvt.s32.f32 %v603
    %605 = vst [vmem:[#allocation5 + $0x5] sm:$0x1] %v604
    %s606 = sld [smem:[#allocation6 + $0x6]]
    %s607 = sld [smem:[#allocation9 + $0x6]]
    %s608 = sld [smem:[#allocation11 + $0x6]]
    %s609 = scalar_lea.vmem [#allocation2], %s606
    %v610 = vld [vmem:[%s609] sm:$0x1]
    %s611 = scalar_lea.vmem [#allocation3], %s607
    %v612 = vld [vmem:[%s611] sm:$0x1]
    %v613 = vadd.f32 %v610, %v612
    %614 = vst [vmem:[#allocation4 + $0x6] sm:$0x1] %v613
    %v615 = vstv %s608
    %vm616 = vcmp.eq.s32.totalorder %v521, %v615
    %v617 = vsel %vm616, 1, 0
    %v618 = vcvt.s32.f32 %v617
    %619 = vst [vmem:[#allocation5 + $0x6] sm:$0x1] %v618
    %s620 = sld [smem:[#allocation6 + $0x7]]
    %s621 = sld [smem:[#allocation9 + $0x7]]
    %s622 = sld [smem:[#allocation11 + $0x7]]
    %s623 = scalar_lea.vmem [#allocation2], %s620
    %v624 = vld [vmem:[%s623] sm:$0x1]
    %s625 = scalar_lea.vmem [#allocation3], %s621
    %v626 = vld [vmem:[%s625] sm:$0x1]
    %v627 = vadd.f32 %v624, %v626
    %628 = vst [vmem:[#allocation4 + $0x7] sm:$0x1] %v627
    %v629 = vstv %s622
    %vm630 = vcmp.eq.s32.totalorder %v521, %v629
    %v631 = vsel %vm630, 1, 0
    %v632 = vcvt.s32.f32 %v631
    %633 = vst [vmem:[#allocation5 + $0x7] sm:$0x1] %v632
    %s634 = sld [smem:[#allocation6 + $0x8]]
    %s635 = sld [smem:[#allocation9 + $0x8]]
    %s636 = sld [smem:[#allocation11 + $0x8]]
    %s637 = scalar_lea.vmem [#allocation2], %s634
    %v638 = vld [vmem:[%s637] sm:$0x1]
    %s639 = scalar_lea.vmem [#allocation3], %s635
    %v640 = vld [vmem:[%s639] sm:$0x1]
    %v641 = vadd.f32 %v638, %v640
    %642 = vst [vmem:[#allocation4 + $0x8] sm:$0x1] %v641
    %v643 = vstv %s636
    %vm644 = vcmp.eq.s32.totalorder %v521, %v643
    %v645 = vsel %vm644, 1, 0
    %v646 = vcvt.s32.f32 %v645
    %647 = vst [vmem:[#allocation5 + $0x8] sm:$0x1] %v646
    %s648 = sld [smem:[#allocation6 + $0x9]]
    %s649 = sld [smem:[#allocation9 + $0x9]]
    %s650 = sld [smem:[#allocation11 + $0x9]]
    %s651 = scalar_lea.vmem [#allocation2], %s648
    %v652 = vld [vmem:[%s651] sm:$0x1]
    %s653 = scalar_lea.vmem [#allocation3], %s649
    %v654 = vld [vmem:[%s653] sm:$0x1]
    %v655 = vadd.f32 %v652, %v654
    %656 = vst [vmem:[#allocation4 + $0x9] sm:$0x1] %v655
    %v657 = vstv %s650
    %vm658 = vcmp.eq.s32.totalorder %v521, %v657
    %v659 = vsel %vm658, 1, 0
    %v660 = vcvt.s32.f32 %v659
    %661 = vst [vmem:[#allocation5 + $0x9] sm:$0x1] %v660
    %s662 = sld [smem:[#allocation6 + $0xa]]
    %s663 = sld [smem:[#allocation9 + $0xa]]
    %s664 = sld [smem:[#allocation11 + $0xa]]
    %s665 = scalar_lea.vmem [#allocation2], %s662
    %v666 = vld [vmem:[%s665] sm:$0x1]
    %s667 = scalar_lea.vmem [#allocation3], %s663
    %v668 = vld [vmem:[%s667] sm:$0x1]
    %v669 = vadd.f32 %v666, %v668
    %670 = vst [vmem:[#allocation4 + $0xa] sm:$0x1] %v669
    %v671 = vstv %s664
    %vm672 = vcmp.eq.s32.totalorder %v521, %v671
    %v673 = vsel %vm672, 1, 0
    %v674 = vcvt.s32.f32 %v673
    %675 = vst [vmem:[#allocation5 + $0xa] sm:$0x1] %v674
    %s676 = sld [smem:[#allocation6 + $0xb]]
    %s677 = sld [smem:[#allocation9 + $0xb]]
    %s678 = sld [smem:[#allocation11 + $0xb]]
    %s679 = scalar_lea.vmem [#allocation2], %s676
    %v680 = vld [vmem:[%s679] sm:$0x1]
    %s681 = scalar_lea.vmem [#allocation3], %s677
    %v682 = vld [vmem:[%s681] sm:$0x1]
    %v683 = vadd.f32 %v680, %v682
    %684 = vst [vmem:[#allocation4 + $0xb] sm:$0x1] %v683
    %v685 = vstv %s678
    %vm686 = vcmp.eq.s32.totalorder %v521, %v685
    %v687 = vsel %vm686, 1, 0
    %v688 = vcvt.s32.f32 %v687
    %689 = vst [vmem:[#allocation5 + $0xb] sm:$0x1] %v688
    %s690 = sld [smem:[#allocation6 + $0xc]]
    %s691 = sld [smem:[#allocation9 + $0xc]]
    %s692 = sld [smem:[#allocation11 + $0xc]]
    %s693 = scalar_lea.vmem [#allocation2], %s690
    %v694 = vld [vmem:[%s693] sm:$0x1]
    %s695 = scalar_lea.vmem [#allocation3], %s691
    %v696 = vld [vmem:[%s695] sm:$0x1]
    %v697 = vadd.f32 %v694, %v696
    %698 = vst [vmem:[#allocation4 + $0xc] sm:$0x1] %v697
    %v699 = vstv %s692
    %vm700 = vcmp.eq.s32.totalorder %v521, %v699
    %v701 = vsel %vm700, 1, 0
    %v702 = vcvt.s32.f32 %v701
    %703 = vst [vmem:[#allocation5 + $0xc] sm:$0x1] %v702
    %s704 = sld [smem:[#allocation6 + $0xd]]
    %s705 = sld [smem:[#allocation9 + $0xd]]
    %s706 = sld [smem:[#allocation11 + $0xd]]
    %s707 = scalar_lea.vmem [#allocation2], %s704
    %v708 = vld [vmem:[%s707] sm:$0x1]
    %s709 = scalar_lea.vmem [#allocation3], %s705
    %v710 = vld [vmem:[%s709] sm:$0x1]
    %v711 = vadd.f32 %v708, %v710
    %712 = vst [vmem:[#allocation4 + $0xd] sm:$0x1] %v711
    %v713 = vstv %s706
    %vm714 = vcmp.eq.s32.totalorder %v521, %v713
    %v715 = vsel %vm714, 1, 0
    %v716 = vcvt.s32.f32 %v715
    %717 = vst [vmem:[#allocation5 + $0xd] sm:$0x1] %v716
    %s718 = sld [smem:[#allocation6 + $0xe]]
    %s719 = sld [smem:[#allocation9 + $0xe]]
    %s720 = sld [smem:[#allocation11 + $0xe]]
    %s721 = scalar_lea.vmem [#allocation2], %s718
    %v722 = vld [vmem:[%s721] sm:$0x1]
    %s723 = scalar_lea.vmem [#allocation3], %s719
    %v724 = vld [vmem:[%s723] sm:$0x1]
    %v725 = vadd.f32 %v722, %v724
    %726 = vst [vmem:[#allocation4 + $0xe] sm:$0x1] %v725
    %v727 = vstv %s720
    %vm728 = vcmp.eq.s32.totalorder %v521, %v727
    %v729 = vsel %vm728, 1, 0
    %v730 = vcvt.s32.f32 %v729
    %731 = vst [vmem:[#allocation5 + $0xe] sm:$0x1] %v730
    %s732 = sld [smem:[#allocation6 + $0xf]]
    %s733 = sld [smem:[#allocation9 + $0xf]]
    %s734 = sld [smem:[#allocation11 + $0xf]]
    %s735 = scalar_lea.vmem [#allocation2], %s732
    %v736 = vld [vmem:[%s735] sm:$0x1]
    %s737 = scalar_lea.vmem [#allocation3], %s733
    %v738 = vld [vmem:[%s737] sm:$0x1]
    %v739 = vadd.f32 %v736, %v738
    %740 = vst [vmem:[#allocation4 + $0xf] sm:$0x1] %v739
    %v741 = vstv %s734
    %vm742 = vcmp.eq.s32.totalorder %v521, %v741
    %v743 = vsel %vm742, 1, 0
    %v744 = vcvt.s32.f32 %v743
    %745 = vst [vmem:[#allocation5 + $0xf] sm:$0x1] %v744
    %s746 = sld [smem:[#allocation6 + $0x10]]
    %s747 = sld [smem:[#allocation9 + $0x10]]
    %s748 = sld [smem:[#allocation11 + $0x10]]
    %s749 = scalar_lea.vmem [#allocation2], %s746
    %v750 = vld [vmem:[%s749] sm:$0x1]
    %s751 = scalar_lea.vmem [#allocation3], %s747
    %v752 = vld [vmem:[%s751] sm:$0x1]
    %v753 = vadd.f32 %v750, %v752
    %754 = vst [vmem:[#allocation4 + $0x10] sm:$0x1] %v753
    %v755 = vstv %s748
    %vm756 = vcmp.eq.s32.totalorder %v521, %v755
    %v757 = vsel %vm756, 1, 0
    %v758 = vcvt.s32.f32 %v757
    %759 = vst [vmem:[#allocation5 + $0x10] sm:$0x1] %v758
    %s760 = sld [smem:[#allocation6 + $0x11]]
    %s761 = sld [smem:[#allocation9 + $0x11]]
    %s762 = sld [smem:[#allocation11 + $0x11]]
    %s763 = scalar_lea.vmem [#allocation2], %s760
    %v764 = vld [vmem:[%s763] sm:$0x1]
    %s765 = scalar_lea.vmem [#allocation3], %s761
    %v766 = vld [vmem:[%s765] sm:$0x1]
    %v767 = vadd.f32 %v764, %v766
    %768 = vst [vmem:[#allocation4 + $0x11] sm:$0x1] %v767
    %v769 = vstv %s762
    %vm770 = vcmp.eq.s32.totalorder %v521, %v769
    %v771 = vsel %vm770, 1, 0
    %v772 = vcvt.s32.f32 %v771
    %773 = vst [vmem:[#allocation5 + $0x11] sm:$0x1] %v772
    %s774 = sld [smem:[#allocation6 + $0x12]]
    %s775 = sld [smem:[#allocation9 + $0x12]]
    %s776 = sld [smem:[#allocation11 + $0x12]]
    %s777 = scalar_lea.vmem [#allocation2], %s774
    %v778 = vld [vmem:[%s777] sm:$0x1]
    %s779 = scalar_lea.vmem [#allocation3], %s775
    %v780 = vld [vmem:[%s779] sm:$0x1]
    %v781 = vadd.f32 %v778, %v780
    %782 = vst [vmem:[#allocation4 + $0x12] sm:$0x1] %v781
    %v783 = vstv %s776
    %vm784 = vcmp.eq.s32.totalorder %v521, %v783
    %v785 = vsel %vm784, 1, 0
    %v786 = vcvt.s32.f32 %v785
    %787 = vst [vmem:[#allocation5 + $0x12] sm:$0x1] %v786
    %s788 = sld [smem:[#allocation6 + $0x13]]
    %s789 = sld [smem:[#allocation9 + $0x13]]
    %s790 = sld [smem:[#allocation11 + $0x13]]
    %s791 = scalar_lea.vmem [#allocation2], %s788
    %v792 = vld [vmem:[%s791] sm:$0x1]
    %s793 = scalar_lea.vmem [#allocation3], %s789
    %v794 = vld [vmem:[%s793] sm:$0x1]
    %v795 = vadd.f32 %v792, %v794
    %796 = vst [vmem:[#allocation4 + $0x13] sm:$0x1] %v795
    %v797 = vstv %s790
    %vm798 = vcmp.eq.s32.totalorder %v521, %v797
    %v799 = vsel %vm798, 1, 0
    %v800 = vcvt.s32.f32 %v799
    %801 = vst [vmem:[#allocation5 + $0x13] sm:$0x1] %v800
    %v802 = vld [vmem:[#allocation4] sm:$0xff]
    %v803 = vld [vmem:[#allocation4 + $0x8] sm:$0xff]
    %v804 = vld [vmem:[#allocation4 + $0x10] sm:$0xf]
    %v805 = vld [vmem:[%s11] sm:$0x1]
    %v807 = vlaneseq
    %v808 = vshrl.u32 %v807, 7
    %v809 = vsub.s32 0, %v808
    %v810 = vrot.slane %v805, %v809
    %v812 = vadd.f32 %v802, %v810
    %v813 = vadd.f32 %v803, %v810
    %v814 = vadd.f32 %v804, %v810
    %v815 = vmul.f32 %v812, 0.5
    %v816 = vmul.f32 %v813, 0.5
    %v817 = vmul.f32 %v814, 0.5
    %v818 = vmul.f32 %v812, 0.044715
    %v819 = vmul.f32 %v813, 0.044715
    %v820 = vmul.f32 %v814, 0.044715
    %v821 = vmul.f32 %v818, %v812
    %v822 = vmul.f32 %v819, %v813
    %v823 = vmul.f32 %v820, %v814
    %v824 = vmul.f32 %v821, %v812
    %v825 = vmul.f32 %v822, %v813
    %v826 = vmul.f32 %v823, %v814
    %v827 = vadd.f32 %v812, %v824
    %v828 = vadd.f32 %v813, %v825
    %v829 = vadd.f32 %v814, %v826
    %v830 = vmul.f32 %v827, 0.7978846
    %v831 = vmul.f32 %v828, 0.7978846
    %v832 = vmul.f32 %v829, 0.7978846
    %v833 = vtanh.pop %v830
    %v834 = vtanh.pop %v831
    %v835 = vtanh.pop %v832
    %v836 = vadd.f32 %v833, 1.0
    %v837 = vadd.f32 %v834, 1.0
    %v838 = vadd.f32 %v835, 1.0
    %v839 = vmul.f32 %v815, %v836
    %v840 = vmul.f32 %v816, %v837
    %v841 = vmul.f32 %v817, %v838
    %v842 = vld [vmem:[%s12] sm:$0xff]
    %v843 = vld [vmem:[%s12 + $0x8] sm:$0xff]
    %v844 = vld [vmem:[%s12 + $0x10] sm:$0xff]
    %v845 = vld [vmem:[%s12 + $0x18] sm:$0xff]
    %v846 = vld [vmem:[%s12 + $0x20] sm:$0xff]
    %v847 = vld [vmem:[%s12 + $0x28] sm:$0xff]
    %v848 = vld [vmem:[%s12 + $0x30] sm:$0xff]
    %v849 = vld [vmem:[%s12 + $0x38] sm:$0xff]
    %v850 = vld [vmem:[%s12 + $0x40] sm:$0xff]
    %v851 = vld [vmem:[%s12 + $0x48] sm:$0xff]
    %v852 = vld [vmem:[%s12 + $0x50] sm:$0xff]
    %v853 = vld [vmem:[%s12 + $0x58] sm:$0xff]
    %v854 = vld [vmem:[%s12 + $0x60] sm:$0xff]
    %v855 = vld [vmem:[%s12 + $0x68] sm:$0xff]
    %v856 = vld [vmem:[%s12 + $0x70] sm:$0xff]
    %v857 = vld [vmem:[%s12 + $0x78] sm:$0xff]
    %v858 = vld [vmem:[%s13] sm:$0x1]
    %v860 = vlaneseq
    %v861 = vshrl.u32 %v860, 7
    %v862 = vsub.s32 0, %v861
    %v863 = vrot.slane %v858, %v862
    %865 = vmatprep.subr.mxu0 0.0
    %866 = vmatpush1.msra.mxu0 %v842
    %867 = vmatprep.subr.mxu0 0.0
    %868 = vmatpush1.msra.mxu0 %v843
    %869 = vmatprep.subr.mxu0 0.0
    %870 = vmatpush1.msra.mxu0 %v844
    %871 = vmatprep.subr.mxu0 0.0
    %872 = vmatpush1.msra.mxu0 %v845
    %873 = vmatprep.subr.mxu0 0.0
    %874 = vmatpush1.msra.mxu0 %v846
    %875 = vmatprep.subr.mxu0 0.0
    %876 = vmatpush1.msra.mxu0 %v847
    %877 = vmatprep.subr.mxu0 0.0
    %878 = vmatpush1.msra.mxu0 %v848
    %879 = vmatprep.subr.mxu0 0.0
    %880 = vmatpush1.msra.mxu0 %v849
    %881 = vmatprep.subr.mxu0 0.0
    %882 = vmatpush1.msra.mxu0 %v850
    %883 = vmatprep.subr.mxu0 0.0
    %884 = vmatpush1.msra.mxu0 %v851
    %885 = vmatprep.subr.mxu0 0.0
    %886 = vmatpush1.msra.mxu0 %v852
    %887 = vmatprep.subr.mxu0 0.0
    %888 = vmatpush1.msra.mxu0 %v853
    %889 = vmatprep.subr.mxu0 0.0
    %890 = vmatpush1.msra.mxu0 %v854
    %891 = vmatprep.subr.mxu0 0.0
    %892 = vmatpush1.msra.mxu0 %v855
    %893 = vmatprep.subr.mxu0 0.0
    %894 = vmatpush1.msra.mxu0 %v856
    %895 = vmatprep.subr.mxu0 0.0
    %896 = vmatpush1.msra.mxu0 %v857
    %897 = vmatprep.subr.mxu0 0.0
    %898 = vmatpush1.msra.mxu0 0.0
    %899 = vmatprep.subr.mxu0 0.0
    %900 = vmatpush1.msra.mxu0 0.0
    %901 = vmatprep.subr.mxu0 0.0
    %902 = vmatpush1.msra.mxu0 0.0
    %903 = vmatprep.subr.mxu0 0.0
    %904 = vmatpush1.msra.mxu0 0.0
    %905 = vmatprep.subr.mxu0 0.0
    %906 = vmatpush1.msra.mxu0 0.0
    %907 = vmatprep.subr.mxu0 0.0
    %908 = vmatpush1.msra.mxu0 0.0
    %909 = vmatprep.subr.mxu0 0.0
    %910 = vmatpush1.msra.mxu0 0.0
    %911 = vmatprep.subr.mxu0 0.0
    %912 = vmatpush1.msra.mxu0 0.0
    %913 = vmatprep.subr.mxu0 0.0
    %914 = vmatpush1.msra.mxu0 0.0
    %915 = vmatprep.subr.mxu0 0.0
    %916 = vmatpush1.msra.mxu0 0.0
    %917 = vmatprep.subr.mxu0 0.0
    %918 = vmatpush1.msra.mxu0 0.0
    %919 = vmatprep.subr.mxu0 0.0
    %920 = vmatpush1.msra.mxu0 0.0
    %921 = vmatprep.subr.mxu0 0.0
    %922 = vmatpush1.msra.mxu0 0.0
    %923 = vmatprep.subr.mxu0 0.0
    %924 = vmatpush1.msra.mxu0 0.0
    %925 = vmatprep.subr.mxu0 0.0
    %926 = vmatpush1.msra.mxu0 0.0
    %927 = vmatprep.subr.mxu0 0.0
    %928 = vmatpush1.msra.mxu0 0.0
    %929 = vmatprep.mubr.f32.mxu0 0.0
    %930 = vmatmul.mubr.f32.gmra.mrb[0].mxu0 %v839
    %v931 = vpop.f32.mrb[0].mxu0
    %v932 = vadd.f32 %v863, %v931
    %v933 = vpop.f32.mrb[0].mxu0
    %934 = vmatprep.mubr.f32.mxu0 0.0
    %935 = vmatmul.mubr.f32.gmra.mrb[0].mxu0 %v840
    %v936 = vpop.f32.mrb[0].mxu0
    %v937 = vadd.f32 %v863, %v936
    %v938 = vpop.f32.mrb[0].mxu0
    %939 = vmatprep.mubr.f32.mxu0 0.0
    %940 = vmatmul.mubr.f32.gmra.mrb[0].mxu0 %v841
    %v941 = vpop.f32.mrb[0].mxu0
    %v942 = vadd.f32 %v863, %v941
    %v943 = vpop.f32.mrb[0].mxu0
    %944 = vdwg.mxu0
    %vm945 = vcmp.lt.s32.totalorder %v521, 2
    %v946 = vsel %vm945, 1, 0
    %vm947 = vcmp.eq.s32.totalorder %v946, 1
    %v948 = vsel %vm947, %v932, -1e+30
    %v949 = vsel %vm947, %v937, -1e+30
    %v950 = vsel %vm947, %v942, -1e+30
    %951 = vmax.xlane.f32.xlu0 %v948
    %v952 = vpop.xlane.xlu0 %951
    %953 = vmax.xlane.f32.xlu0 %v949
    %v954 = vpop.xlane.xlu0 %953
    %vm955 = vcmask 1043456
    %v956 = vsel %vm955, %v950, -inf
    %957 = vmax.xlane.f32.xlu0 %v956
    %v958 = vpop.xlane.xlu0 %957
    %v959 = vsub.f32 %v948, %v952
    %v960 = vsub.f32 %v949, %v954
    %v961 = vsub.f32 %v950, %v958
    %v962 = vmul.f32 %v959, 1.442695
    %v963 = vpow.pop %v962
    %v964 = vmul.f32 %v960, 1.442695
    %v965 = vpow.pop %v964
    %v966 = vmul.f32 %v961, 1.442695
    %v967 = vpow.pop %v966
    %968 = vadd.xlane.f32.xlu0 %v963
    %v969 = vpop.xlane.xlu0 %968
    %970 = vadd.xlane.f32.xlu0 %v965
    %v971 = vpop.xlane.xlu0 %970
    %v972 = vsel %vm955, %v967, 0.0
    %973 = vadd.xlane.f32.xlu0 %v972
    %v974 = vpop.xlane.xlu0 %973
    %v975 = vrcp.pop %v969
    %v976 = vmul.f32 %v963, %v975
    %v977 = vrcp.pop %v971
    %v978 = vmul.f32 %v965, %v977
    %v979 = vrcp.pop %v974
    %v980 = vmul.f32 %v967, %v979
    %981 = vst [vmem:[%s15] sm:$0xff] %v976
    %982 = vst [vmem:[%s15 + $0x8] sm:$0xff] %v978
    %983 = vst [vmem:[%s15 + $0x10] sm:$0xf] %v980
    %v984 = vlog2.pop %v969
    %v985 = vmul.f32 %v984, 0.6931472
    %v986 = vlog2.pop %v971
    %v987 = vmul.f32 %v986, 0.6931472
    %v988 = vlog2.pop %v974
    %v989 = vmul.f32 %v988, 0.6931472
    %v990 = vsub.f32 %v959, %v985
    %v991 = vsub.f32 %v960, %v987
    %v992 = vsub.f32 %v961, %v989
    %v993 = vld [vmem:[#allocation5] sm:$0xff]
    %v994 = vld [vmem:[#allocation5 + $0x8] sm:$0xff]
    %v995 = vld [vmem:[#allocation5 + $0x10] sm:$0xf]
    %v996 = vld [vmem:[%s14] sm:$0x1]
    %v998 = vlaneseq
    %v999 = vshrl.u32 %v998, 7
    %v1000 = vsub.s32 0, %v999
    %v1001 = vrot.slane %v996, %v1000
    %v1003 = vmul.f32 %v1001, %v993
    %v1004 = vmul.f32 %v1001, %v994
    %v1005 = vmul.f32 %v1001, %v995
    %1006 = vadd.xlane.f32.xlu0 %v1003
    %v1007 = vpop.xlane.xlu0 %1006
    %1008 = vadd.xlane.f32.xlu0 %v1004
    %v1009 = vpop.xlane.xlu0 %1008
    %v1010 = vsel %vm955, %v1005, 0.0
    %1011 = vadd.xlane.f32.xlu0 %v1010
    %v1012 = vpop.xlane.xlu0 %1011
    %v1013 = vmul.f32 %v990, %v993
    %v1014 = vmul.f32 %v991, %v994
    %v1015 = vmul.f32 %v992, %v995
    %1016 = vadd.xlane.f32.xlu0 %v1013
    %v1017 = vpop.xlane.xlu0 %1016
    %1018 = vadd.xlane.f32.xlu0 %v1014
    %v1019 = vpop.xlane.xlu0 %1018
    %v1020 = vsel %vm955, %v1015, 0.0
    %1021 = vadd.xlane.f32.xlu0 %v1020
    %v1022 = vpop.xlane.xlu0 %1021
    %v1023 = vsub.f32 0.0, %v1017
    %v1024 = vsub.f32 0.0, %v1019
    %v1025 = vsub.f32 0.0, %v1022
    %v1026 = vmul.f32 %v1007, %v1023
    %v1027 = vmul.f32 %v1009, %v1024
    %v1028 = vmul.f32 %v1012, %v1025
    %v1029 = vadd.f32 %v1026, %v1027
    %v1030 = vsel %vm955, %v1028, 0.0
    %v1031 = vadd.f32 %v1029, %v1030
    %v1032 = vrot.slane %v1031, 4
    %v1033 = vadd.f32 %v1031, %v1032
    %v1034 = vrot.slane %v1033, 2
    %v1035 = vadd.f32 %v1033, %v1034
    %v1036 = vrot.slane %v1035, 1
    %v1037 = vadd.f32 %v1035, %v1036
    %v1038 = vadd.f32 %v1007, %v1009
    %v1039 = vsel %vm955, %v1012, 0.0
    %v1040 = vadd.f32 %v1038, %v1039
    %v1041 = vrot.slane %v1040, 4
    %v1042 = vadd.f32 %v1040, %v1041
    %v1043 = vrot.slane %v1042, 2
    %v1044 = vadd.f32 %v1042, %v1043
    %v1045 = vrot.slane %v1044, 1
    %v1046 = vadd.f32 %v1044, %v1045
    %v1047 = vrcp.pop %v1046
    %v1048 = vmul.f32 %v1037, %v1047
    %vm1049 = vcmask 0
    %1050 = vst.msk [vmem:[#allocation12] sm:$0x1] %vm1049, %v1048
    // Predicated region
    $region74: #{gcn_edge_forward.1} parent=1 // pred_check
      _
    $region75: #{gcn_edge_forward.1} parent=1 // pred_check_branch
      %1052 = sbr.rel (0) target = $region77
    $region76: #{gcn_edge_forward.1} parent=1 // pred_region
      _
    $region77: #{gcn_edge_forward.1} parent=1 // pred_fallthru
      _
    // Predicated region
    $region78: #{gcn_edge_forward.1} parent=1 // pred_check
      _
    $region79: #{gcn_edge_forward.1} parent=1 // pred_check_branch
      %1054 = sbr.rel (0) target = $region81
    $region80: #{gcn_edge_forward.1} parent=1 // pred_region
      %s1056 = ssub.s32 16, 16
      %1057 = vsyncadd [#allocation7], %s1056
      %s1059 = sshll.u32 [#allocation12], 4
      %s1060 = int_to_ptr.vmem [resolvable:$true] %s1059
      %1062 = dma.vmem_to_hbm [thread:$0]  %s1060, 16, %s16, [#allocation7]
    $region81: #{gcn_edge_forward.1} parent=1 // pred_fallthru
      _
    // Predicated region
    $region82: #{gcn_edge_forward.1} parent=1 // pred_check
      _
    $region83: #{gcn_edge_forward.1} parent=1 // pred_check_branch
      %1064 = sbr.rel (0) target = $region85
    $region84: #{gcn_edge_forward.1} parent=1 // pred_region
      _
    $region85: #{gcn_edge_forward.1} parent=1 // pred_fallthru
      _
    // Predicated region
    $region86: #{gcn_edge_forward.1} parent=1 // pred_check
      _
    $region87: #{gcn_edge_forward.1} parent=1 // pred_check_branch
      %1066 = sbr.rel (0) target = $region89
    $region88: #{gcn_edge_forward.1} parent=1 // pred_region
      %1067 = dma.done [#allocation7], 16
    $region89: #{gcn_edge_forward.1} parent=1 // pred_fallthru
      _
    %1068 = vsyncpa [#allocation7], 1
    %1069 = vsyncpa [#allocation8], 1
    %1070 = vsyncpa [#allocation10], 1

</llo_original>
